<compile_context>
chip_gen: v5e
topology: v5e:2x2
jax: 0.10.0
libtpu: 0.0.40
codegen_flags: <defaults>
</compile_context>

<pallas_src>
import math
import functools

import jax
import jax.numpy as jnp
from jax import lax
from jax.experimental import pallas as pl
from jax.experimental.pallas import tpu as pltpu


def _default_vmem_limit():
    """Per-generation scoped-VMEM budget: ~40 MiB on v7x (64 MiB/TC), ~96 MiB on v5e/v6e."""
    cap = None
    try:
        info = pltpu.get_tpu_info()
        cap = getattr(info, "vmem_capacity_bytes", None)
    except Exception:
        cap = None
    if cap is None:
        return 48 << 20                 # conservative fallback
    if cap <= (64 << 20):               # v7x: leave headroom for internal scratch
        return 40 << 20
    return 96 << 20                     # v5e / v6e: 128 MiB physical


VMEM_LIMIT = _default_vmem_limit()


def _row_tile(n, target=512):
    """Largest row tile <= target that divides n (multiple of 8 when possible)."""
    if n <= target:
        return n
    for t in range(target, 7, -8):
        if n % t == 0:
            return t
    return n


def _q_tile(s, target=256):
    """Query tile for the attention grid (bounds the (tq, S) score matrix, >=2 steps/core)."""
    if s <= target:
        return s
    for t in range(target, 7, -8):
        if s % t == 0:
            return t
    return s


# ----------------------------------------------------------------------------- kernels

def _qkv_kernel(x_ref, pos_ref, wqk_ref, bqk_ref, wv_ref, bv_ref, q_ref, k_ref, v_ref):
    # x/pos: (TM, D) f32; wqk: (D, 2D) bf16 (q-half pre-scaled by 1/sqrt(dh)); wv: (D, D) bf16
    x = x_ref[...]
    xp = (x + pos_ref[...]).astype(jnp.bfloat16)           # q = k = with_pos_embed(src, pos)
    qk = jnp.dot(xp, wqk_ref[...], preferred_element_type=jnp.float32) + bqk_ref[...]
    d = q_ref.shape[-1]
    q_ref[...] = qk[:, :d].astype(q_ref.dtype)              # bf16 stores: halve HBM traffic
    k_ref[...] = qk[:, d:].astype(k_ref.dtype)
    v_ref[...] = (jnp.dot(x.astype(jnp.bfloat16), wv_ref[...],
                          preferred_element_type=jnp.float32) + bv_ref[...]).astype(v_ref.dtype)


def _attn_kernel(q_ref, k_ref, v_ref, m_ref, o_ref, *, nhead):
    # grid step = (batch, query-tile). q: (1, tq, D) bf16; k/v: (1, S, D) bf16;
    # mask: (1, 1, S) additive f32 (-1e30 on padded keys). q pre-scaled by 1/sqrt(dh).
    q = q_ref[0]                                            # (tq, D) bf16
    k = k_ref[0]                                            # (S, D)  bf16
    v = v_ref[0]                                            # (S, D)  bf16
    tq = q.shape[0]
    s_len = k.shape[0]
    d = q.shape[-1]
    dh = d // nhead
    # hoist the mask broadcast once (JAX does not CSE broadcast_in_dim across the head loop)
    mask_b = jnp.broadcast_to(m_ref[0], (tq, s_len))        # (tq, S) f32
    for h in range(nhead):                                  # per-head contractions, lane-packed
        sl = slice(h * dh, (h + 1) * dh)
        # contract the head dims directly (no transposed copy of k)
        s = lax.dot_general(q[:, sl], k[:, sl], (((1,), (1,)), ((), ())),
                            preferred_element_type=jnp.float32)      # (tq, S)
        s = s + mask_b
        s_max = jnp.max(s, axis=-1, keepdims=True)
        p = jnp.exp(s - s_max)
        denom = jnp.sum(p, axis=-1, keepdims=True)
        p = p * pl.reciprocal(denom, approx=True)           # softmax normalize on the EUP
        # store this head's slice directly; no concatenate, no long-lived partials
        o_ref[0, :, sl] = jnp.dot(p.astype(jnp.bfloat16), v[:, sl],
                                  preferred_element_type=jnp.float32).astype(o_ref.dtype)


def _post_attn_kernel(attn_ref, res_ref, wo_ref, bo_ref, g1_ref, be1_ref,
                      w1_ref, b1_ref, w2_ref, b2_ref, g2_ref, be2_ref, o_ref):
    # Fused: src1 = LN1(res + attn @ Wo + bo); out = LN2(src1 + W2 @ relu(W1 @ src1))
    y = (jnp.dot(attn_ref[...], wo_ref[...], preferred_element_type=jnp.float32) + bo_ref[...])
    h = res_ref[...] + y
    mu = jnp.mean(h, axis=-1, keepdims=True)
    var = jnp.mean((h - mu) ** 2, axis=-1, keepdims=True)
    src1 = (h - mu) * lax.rsqrt(var + 1e-5) * g1_ref[...] + be1_ref[...]

    h1 = (jnp.dot(src1.astype(jnp.bfloat16), w1_ref[...],
                  preferred_element_type=jnp.float32) + b1_ref[...])
    h1 = jnp.maximum(h1, 0.0)
    y2 = (jnp.dot(h1.astype(jnp.bfloat16), w2_ref[...],
                  preferred_element_type=jnp.float32) + b2_ref[...])
    h2 = src1 + y2
    mu2 = jnp.mean(h2, axis=-1, keepdims=True)
    var2 = jnp.mean((h2 - mu2) ** 2, axis=-1, keepdims=True)
    o_ref[...] = (h2 - mu2) * lax.rsqrt(var2 + 1e-5) * g2_ref[...] + be2_ref[...]


# ----------------------------------------------------------------------------- wrappers

def _full_spec(arr):
    return pl.BlockSpec(arr.shape, lambda i: (0,) * arr.ndim)


def qkv_proj(x_flat, pos_flat, w_qk, b_qk, wv, bv):
    n, d = x_flat.shape
    tm = _row_tile(n)
    row_spec = pl.BlockSpec((tm, d), lambda i: (i, 0))
    out_sd = jax.ShapeDtypeStruct((n, d), jnp.bfloat16)     # bf16 intermediates (MXU-bound use)
    cost = pl.CostEstimate(flops=2 * n * d * 3 * d, transcendentals=0,
                           bytes_accessed=4 * n * d * 2 + 2 * n * d * 3 + 2 * 3 * d * d)
    return pl.pallas_call(
        _qkv_kernel,
        out_shape=(out_sd, out_sd, out_sd),
        grid=(n // tm,),
        in_specs=[row_spec, row_spec,
                  _full_spec(w_qk), _full_spec(b_qk), _full_spec(wv), _full_spec(bv)],
        out_specs=(row_spec, row_spec, row_spec),
        compiler_params=pltpu.CompilerParams(dimension_semantics=("parallel",),
                                             vmem_limit_bytes=VMEM_LIMIT),
        cost_estimate=cost,
    )(x_flat, pos_flat, w_qk, b_qk, wv, bv)


def multihead_attention(q_bsd, k_bsd, v_bsd, mask_add, nhead):
    # q/k/v: (B, S, D) bf16 with heads packed along D; mask_add: (B, 1, S) f32
    b, s, d = q_bsd.shape
    tq = _q_tile(s)
    spec_q = pl.BlockSpec((1, tq, d), lambda bi, qi: (bi, qi, 0))
    spec_kv = pl.BlockSpec((1, s, d), lambda bi, qi: (bi, 0, 0))
    spec_msk = pl.BlockSpec((1, 1, s), lambda bi, qi: (bi, 0, 0))
    kern = functools.partial(_attn_kernel, nhead=nhead)
    cost = pl.CostEstimate(flops=4 * b * s * s * d,
                           transcendentals=b * s * s,
                           bytes_accessed=2 * 3 * b * s * d + 2 * b * s * d + 4 * b * s)
    return pl.pallas_call(
        kern,
        out_shape=jax.ShapeDtypeStruct((b, s, d), jnp.bfloat16),
        grid=(b, s // tq),
        in_specs=[spec_q, spec_kv, spec_kv, spec_msk],
        out_specs=pl.BlockSpec((1, tq, d), lambda bi, qi: (bi, qi, 0)),
        compiler_params=pltpu.CompilerParams(dimension_semantics=("parallel", "parallel"),
                                             vmem_limit_bytes=VMEM_LIMIT),
        cost_estimate=cost,
    )(q_bsd, k_bsd, v_bsd, mask_add)


def post_attn_block(attn_flat, residual, p):
    # Fused out-projection + residual + LN1 + FFN + residual + LN2 (row-tiled over N = B*S).
    n, d = residual.shape
    f = p["w1"].shape[1]
    tm = _row_tile(n)
    row_bf16 = pl.BlockSpec((tm, d), lambda i: (i, 0))
    row_f32 = pl.BlockSpec((tm, d), lambda i: (i, 0))
    cost = pl.CostEstimate(
        flops=2 * n * d * d + 4 * n * d * f, transcendentals=0,
        bytes_accessed=2 * n * d + 4 * n * d * 2 + 2 * (d * d + 2 * d * f))
    return pl.pallas_call(
        _post_attn_kernel,
        out_shape=jax.ShapeDtypeStruct((n, d), jnp.float32),
        grid=(n // tm,),
        in_specs=[row_bf16, row_f32,
                  _full_spec(p["wo"]), _full_spec(p["bo"]),
                  _full_spec(p["ln1_g"]), _full_spec(p["ln1_b"]),
                  _full_spec(p["w1"]), _full_spec(p["b1"]),
                  _full_spec(p["w2"]), _full_spec(p["b2"]),
                  _full_spec(p["ln2_g"]), _full_spec(p["ln2_b"])],
        out_specs=row_f32,
        compiler_params=pltpu.CompilerParams(dimension_semantics=("parallel",),
                                             vmem_limit_bytes=VMEM_LIMIT),
        cost_estimate=cost,
    )(attn_flat, residual, p["wo"], p["bo"], p["ln1_g"], p["ln1_b"],
      p["w1"], p["b1"], p["w2"], p["b2"], p["ln2_g"], p["ln2_b"])


# ----------------------------------------------------------------------------- model

def encoder_layer(x_bsd, pos_bsd, mask_add, p, nhead):
    """One post-norm TransformerEncoderLayer. x/pos: (B, S, D) f32."""
    B, S, D = x_bsd.shape
    x_flat = x_bsd.reshape(B * S, D)
    pos_flat = pos_bsd.reshape(B * S, D)

    q, k, v = qkv_proj(x_flat, pos_flat, p["w_qk"], p["b_qk"], p["wv"], p["bv"])

    attn = multihead_attention(q.reshape(B, S, D), k.reshape(B, S, D),
                               v.reshape(B, S, D), mask_add, nhead)
    attn_flat = attn.reshape(B * S, D)

    # fused: out-projection + residual + norm1 + FFN + residual + norm2
    out = post_attn_block(attn_flat, x_flat, p)
    return out.reshape(B, S, D)


def vision_language_encoder(src, mask, pos_embed, layer_params, nhead):
    """Forward of VisionLanguageEncoder (normalize_before=False => no final norm).

    src/pos_embed: (S, B, D) float32; mask: (B, S) bool (True = padded key).
    """
    # single layout change for the whole stack: (S, B, D) -> (B, S, D)
    x = src.transpose(1, 0, 2)
    pos = pos_embed.transpose(1, 0, 2)
    # key_padding_mask -> additive mask (B, 1, S); large finite negative avoids NaN on
    # fully-padded rows (matches PyTorch whenever a row is not fully masked).
    mask_add = jnp.where(mask, -1e30, 0.0).astype(jnp.float32)[:, None, :]

    for p in layer_params:
        x = encoder_layer(x, pos, mask_add, p, nhead)
    return x.transpose(1, 0, 2)


# ----------------------------------------------------------------------------- params

def xavier(key, shape):
    fan_in, fan_out = shape[0], shape[1]
    lim = math.sqrt(6.0 / (fan_in + fan_out))
    return jax.random.uniform(key, shape, jnp.float32, -lim, lim)


def make_layer_params(key, d_model, dim_ff, nhead):
    ks = jax.random.split(key, 6)
    D, F = d_model, dim_ff
    scale = 1.0 / math.sqrt(D // nhead)
    # fold 1/sqrt(dh) into the q projection (bias is zero, so no bias scaling needed;
    # if pretrained nonzero q biases are ever loaded, scale b_q too).
    wq = xavier(ks[0], (D, D)) * scale
    wk = xavier(ks[1], (D, D))
    return {
        # fused q|k in-projection (pre-transposed: x @ W), bf16 for the MXU
        "w_qk": jnp.concatenate([wq, wk], axis=1).astype(jnp.bfloat16),   # (D, 2D)
        "b_qk": jnp.zeros((1, 2 * D), jnp.float32),
        "wv": xavier(ks[2], (D, D)).astype(jnp.bfloat16),
        "bv": jnp.zeros((1, D), jnp.float32),
        # attention out-projection
        "wo": xavier(ks[3], (D, D)).astype(jnp.bfloat16),
        "bo": jnp.zeros((1, D), jnp.float32),
        # feed-forward
        "w1": xavier(ks[4], (D, F)).astype(jnp.bfloat16),
        "b1": jnp.zeros((1, F), jnp.float32),
        "w2": xavier(ks[5], (F, D)).astype(jnp.bfloat16),
        "b2": jnp.zeros((1, D), jnp.float32),
        # layer norms (f32)
        "ln1_g": jnp.ones((1, D), jnp.float32), "ln1_b": jnp.zeros((1, D), jnp.float32),
        "ln2_g": jnp.ones((1, D), jnp.float32), "ln2_b": jnp.zeros((1, D), jnp.float32),
    }


# ----------------------------------------------------------------------------- main

if __name__ == "__main__":
    S, B, D, H, FF, L = 8, 2, 32, 4, 64, 2   # seq, batch, d_model, heads, ffn, layers

    root = jax.random.PRNGKey(0)
    k_src, k_pos, k_params = jax.random.split(root, 3)

    src = jax.random.normal(k_src, (S, B, D), jnp.float32)
    pos = jax.random.normal(k_pos, (S, B, D), jnp.float32)
    # key padding mask: last token of each batch element is padding
    mask = jnp.zeros((B, S), dtype=bool).at[:, S - 1].set(True)

    layer_keys = jax.random.split(k_params, L)
    params = [make_layer_params(k, D, FF, H) for k in layer_keys]

    fwd = jax.jit(functools.partial(vision_language_encoder, nhead=H))
    out = fwd(src, mask, pos, params)
    out = jax.block_until_ready(out)
    assert out.shape == (S, B, D)
    assert bool(jnp.all(jnp.isfinite(out)))
    print("KERNEL_OK")
</pallas_src>

<mosaic_0001>
module attributes {stable_mosaic.version = 11 : i64} {
  func.func @_qkv_kernel(%arg0: i32, %arg1: memref<16x32xf32, #tpu.memory_space<vmem>>, %arg2: memref<16x32xf32, #tpu.memory_space<vmem>>, %arg3: memref<32x64xbf16, #tpu.memory_space<vmem>>, %arg4: memref<1x64xf32, #tpu.memory_space<vmem>>, %arg5: memref<32x32xbf16, #tpu.memory_space<vmem>>, %arg6: memref<1x32xf32, #tpu.memory_space<vmem>>, %arg7: memref<16x32xbf16, #tpu.memory_space<vmem>>, %arg8: memref<16x32xbf16, #tpu.memory_space<vmem>>, %arg9: memref<16x32xbf16, #tpu.memory_space<vmem>>) attributes {dimension_semantics = [#tpu.dimension_semantics<parallel>], iteration_bounds = array<i64: 1>, scalar_prefetch = 0 : i64, scratch_operands = 0 : i64, tpu.core_type = #tpu.core_type<tc>, window_params = [{transform_indices = @transform_0, window_bounds = array<i64: 16, 32>}, {transform_indices = @transform_1, window_bounds = array<i64: 16, 32>}, {pipeline_mode = #tpu.pipeline_mode<synchronous>, transform_indices = @transform_2, window_bounds = array<i64: 32, 64>}, {pipeline_mode = #tpu.pipeline_mode<synchronous>, transform_indices = @transform_3, window_bounds = array<i64: 1, 64>}, {pipeline_mode = #tpu.pipeline_mode<synchronous>, transform_indices = @transform_4, window_bounds = array<i64: 32, 32>}, {pipeline_mode = #tpu.pipeline_mode<synchronous>, transform_indices = @transform_5, window_bounds = array<i64: 1, 32>}, {transform_indices = @transform_6, window_bounds = array<i64: 16, 32>}, {transform_indices = @transform_7, window_bounds = array<i64: 16, 32>}, {transform_indices = @transform_8, window_bounds = array<i64: 16, 32>}]} {
    %c0 = arith.constant 0 : index
    %c0_0 = arith.constant 0 : index
    %0 = vector.load %arg1[%c0, %c0_0] : memref<16x32xf32, #tpu.memory_space<vmem>>, vector<16x32xf32>
    %c0_1 = arith.constant 0 : index
    %c0_2 = arith.constant 0 : index
    %1 = vector.load %arg2[%c0_1, %c0_2] : memref<16x32xf32, #tpu.memory_space<vmem>>, vector<16x32xf32>
    %2 = arith.addf %0, %1 : vector<16x32xf32>
    %3 = arith.truncf %2 : vector<16x32xf32> to vector<16x32xbf16>
    %c0_3 = arith.constant 0 : index
    %c0_4 = arith.constant 0 : index
    %4 = vector.load %arg3[%c0_3, %c0_4] : memref<32x64xbf16, #tpu.memory_space<vmem>>, vector<32x64xbf16>
    %cst = arith.constant dense<0.000000e+00> : vector<16x64xf32>
    %5 = tpu.matmul %3, %4, %cst {dimension_numbers = #tpu.dot_dimension_numbers<[1], [0], [0], [1], [0, 0, 1, 1], [], []>} : vector<16x32xbf16>, vector<32x64xbf16>, vector<16x64xf32> -> vector<16x64xf32>
    %c0_5 = arith.constant 0 : index
    %c0_6 = arith.constant 0 : index
    %6 = vector.load %arg4[%c0_5, %c0_6] : memref<1x64xf32, #tpu.memory_space<vmem>>, vector<1x64xf32>
    %7 = vector.broadcast %6 : vector<1x64xf32> to vector<16x64xf32>
    %8 = arith.addf %5, %7 : vector<16x64xf32>
    %9 = vector.extract_strided_slice %8 {offsets = [0, 0], sizes = [16, 32], strides = [1, 1]} : vector<16x64xf32> to vector<16x32xf32>
    %10 = arith.truncf %9 : vector<16x32xf32> to vector<16x32xbf16>
    %c0_7 = arith.constant 0 : index
    %c0_8 = arith.constant 0 : index
    %11 = vector.load %arg7[%c0_7, %c0_8] : memref<16x32xbf16, #tpu.memory_space<vmem>>, vector<16x32xbf16>
    tpu.vector_store %arg7[%c0_7, %c0_8], %10 {strides = array<i32>} : memref<16x32xbf16, #tpu.memory_space<vmem>>, vector<16x32xbf16>,
    %12 = vector.extract_strided_slice %8 {offsets = [0, 32], sizes = [16, 32], strides = [1, 1]} : vector<16x64xf32> to vector<16x32xf32>
    %13 = arith.truncf %12 : vector<16x32xf32> to vector<16x32xbf16>
    %c0_9 = arith.constant 0 : index
    %c0_10 = arith.constant 0 : index
    %14 = vector.load %arg8[%c0_9, %c0_10] : memref<16x32xbf16, #tpu.memory_space<vmem>>, vector<16x32xbf16>
    tpu.vector_store %arg8[%c0_9, %c0_10], %13 {strides = array<i32>} : memref<16x32xbf16, #tpu.memory_space<vmem>>, vector<16x32xbf16>,
    %15 = arith.truncf %0 : vector<16x32xf32> to vector<16x32xbf16>
    %c0_11 = arith.constant 0 : index
    %c0_12 = arith.constant 0 : index
    %16 = vector.load %arg5[%c0_11, %c0_12] : memref<32x32xbf16, #tpu.memory_space<vmem>>, vector<32x32xbf16>
    %cst_13 = arith.constant dense<0.000000e+00> : vector<16x32xf32>
    %17 = tpu.matmul %15, %16, %cst_13 {dimension_numbers = #tpu.dot_dimension_numbers<[1], [0], [0], [1], [0, 0, 1, 1], [], []>} : vector<16x32xbf16>, vector<32x32xbf16>, vector<16x32xf32> -> vector<16x32xf32>
    %c0_14 = arith.constant 0 : index
    %c0_15 = arith.constant 0 : index
    %18 = vector.load %arg6[%c0_14, %c0_15] : memref<1x32xf32, #tpu.memory_space<vmem>>, vector<1x32xf32>
    %19 = vector.broadcast %18 : vector<1x32xf32> to vector<16x32xf32>
    %20 = arith.addf %17, %19 : vector<16x32xf32>
    %21 = arith.truncf %20 : vector<16x32xf32> to vector<16x32xbf16>
    %c0_16 = arith.constant 0 : index
    %c0_17 = arith.constant 0 : index
    %22 = vector.load %arg9[%c0_16, %c0_17] : memref<16x32xbf16, #tpu.memory_space<vmem>>, vector<16x32xbf16>
    tpu.vector_store %arg9[%c0_16, %c0_17], %21 {strides = array<i32>} : memref<16x32xbf16, #tpu.memory_space<vmem>>, vector<16x32xbf16>,
    return
  }
  func.func @transform_0(%arg0: i32) -> (i32, i32) {
    %c0_i32 = arith.constant 0 : i32
    %c0_i32_0 = arith.constant 0 : i32
    return %arg0, %c0_i32 : i32, i32
  }
  func.func @transform_1(%arg0: i32) -> (i32, i32) {
    %c0_i32 = arith.constant 0 : i32
    %c0_i32_0 = arith.constant 0 : i32
    return %arg0, %c0_i32 : i32, i32
  }
  func.func @transform_2(%arg0: i32) -> (i32, i32) {
    %c0_i32 = arith.constant 0 : i32
    %c0_i32_0 = arith.constant 0 : i32
    %c0_i32_1 = arith.constant 0 : i32
    return %c0_i32, %c0_i32_0 : i32, i32
  }
  func.func @transform_3(%arg0: i32) -> (i32, i32) {
    %c0_i32 = arith.constant 0 : i32
    %c0_i32_0 = arith.constant 0 : i32
    %c0_i32_1 = arith.constant 0 : i32
    return %c0_i32, %c0_i32_0 : i32, i32
  }
  func.func @transform_4(%arg0: i32) -> (i32, i32) {
    %c0_i32 = arith.constant 0 : i32
    %c0_i32_0 = arith.constant 0 : i32
    %c0_i32_1 = arith.constant 0 : i32
    return %c0_i32, %c0_i32_0 : i32, i32
  }
  func.func @transform_5(%arg0: i32) -> (i32, i32) {
    %c0_i32 = arith.constant 0 : i32
    %c0_i32_0 = arith.constant 0 : i32
    %c0_i32_1 = arith.constant 0 : i32
    return %c0_i32, %c0_i32_0 : i32, i32
  }
  func.func @transform_6(%arg0: i32) -> (i32, i32) {
    %c0_i32 = arith.constant 0 : i32
    %c0_i32_0 = arith.constant 0 : i32
    return %arg0, %c0_i32 : i32, i32
  }
  func.func @transform_7(%arg0: i32) -> (i32, i32) {
    %c0_i32 = arith.constant 0 : i32
    %c0_i32_0 = arith.constant 0 : i32
    return %arg0, %c0_i32 : i32, i32
  }
  func.func @transform_8(%arg0: i32) -> (i32, i32) {
    %c0_i32 = arith.constant 0 : i32
    %c0_i32_0 = arith.constant 0 : i32
    return %arg0, %c0_i32 : i32, i32
  }
}

module attributes {stable_mosaic.version = 11 : i64} {
  func.func @_post_attn_kernel(%arg0: i32, %arg1: memref<16x32xbf16, #tpu.memory_space<vmem>>, %arg2: memref<16x32xf32, #tpu.memory_space<vmem>>, %arg3: memref<32x32xbf16, #tpu.memory_space<vmem>>, %arg4: memref<1x32xf32, #tpu.memory_space<vmem>>, %arg5: memref<1x32xf32, #tpu.memory_space<vmem>>, %arg6: memref<1x32xf32, #tpu.memory_space<vmem>>, %arg7: memref<32x64xbf16, #tpu.memory_space<vmem>>, %arg8: memref<1x64xf32, #tpu.memory_space<vmem>>, %arg9: memref<64x32xbf16, #tpu.memory_space<vmem>>, %arg10: memref<1x32xf32, #tpu.memory_space<vmem>>, %arg11: memref<1x32xf32, #tpu.memory_space<vmem>>, %arg12: memref<1x32xf32, #tpu.memory_space<vmem>>, %arg13: memref<16x32xf32, #tpu.memory_space<vmem>>) attributes {dimension_semantics = [#tpu.dimension_semantics<parallel>], iteration_bounds = array<i64: 1>, scalar_prefetch = 0 : i64, scratch_operands = 0 : i64, tpu.core_type = #tpu.core_type<tc>, window_params = [{transform_indices = @transform_0, window_bounds = array<i64: 16, 32>}, {transform_indices = @transform_1, window_bounds = array<i64: 16, 32>}, {pipeline_mode = #tpu.pipeline_mode<synchronous>, transform_indices = @transform_2, window_bounds = array<i64: 32, 32>}, {pipeline_mode = #tpu.pipeline_mode<synchronous>, transform_indices = @transform_3, window_bounds = array<i64: 1, 32>}, {pipeline_mode = #tpu.pipeline_mode<synchronous>, transform_indices = @transform_4, window_bounds = array<i64: 1, 32>}, {pipeline_mode = #tpu.pipeline_mode<synchronous>, transform_indices = @transform_5, window_bounds = array<i64: 1, 32>}, {pipeline_mode = #tpu.pipeline_mode<synchronous>, transform_indices = @transform_6, window_bounds = array<i64: 32, 64>}, {pipeline_mode = #tpu.pipeline_mode<synchronous>, transform_indices = @transform_7, window_bounds = array<i64: 1, 64>}, {pipeline_mode = #tpu.pipeline_mode<synchronous>, transform_indices = @transform_8, window_bounds = array<i64: 64, 32>}, {pipeline_mode = #tpu.pipeline_mode<synchronous>, transform_indices = @transform_9, window_bounds = array<i64: 1, 32>}, {pipeline_mode = #tpu.pipeline_mode<synchronous>, transform_indices = @transform_10, window_bounds = array<i64: 1, 32>}, {pipeline_mode = #tpu.pipeline_mode<synchronous>, transform_indices = @transform_11, window_bounds = array<i64: 1, 32>}, {transform_indices = @transform_12, window_bounds = array<i64: 16, 32>}]} {
    %c0 = arith.constant 0 : index
    %c0_0 = arith.constant 0 : index
    %0 = vector.load %arg1[%c0, %c0_0] : memref<16x32xbf16, #tpu.memory_space<vmem>>, vector<16x32xbf16>
    %c0_1 = arith.constant 0 : index
    %c0_2 = arith.constant 0 : index
    %1 = vector.load %arg3[%c0_1, %c0_2] : memref<32x32xbf16, #tpu.memory_space<vmem>>, vector<32x32xbf16>
    %cst = arith.constant dense<0.000000e+00> : vector<16x32xf32>
    %2 = tpu.matmul %0, %1, %cst {dimension_numbers = #tpu.dot_dimension_numbers<[1], [0], [0], [1], [0, 0, 1, 1], [], []>} : vector<16x32xbf16>, vector<32x32xbf16>, vector<16x32xf32> -> vector<16x32xf32>
    %c0_3 = arith.constant 0 : index
    %c0_4 = arith.constant 0 : index
    %3 = vector.load %arg4[%c0_3, %c0_4] : memref<1x32xf32, #tpu.memory_space<vmem>>, vector<1x32xf32>
    %4 = vector.broadcast %3 : vector<1x32xf32> to vector<16x32xf32>
    %5 = arith.addf %2, %4 : vector<16x32xf32>
    %c0_5 = arith.constant 0 : index
    %c0_6 = arith.constant 0 : index
    %6 = vector.load %arg2[%c0_5, %c0_6] : memref<16x32xf32, #tpu.memory_space<vmem>>, vector<16x32xf32>
    %7 = arith.addf %6, %5 : vector<16x32xf32>
    %cst_7 = arith.constant dense<0.000000e+00> : vector<16xf32>
    %8 = vector.multi_reduction <add>, %7, %cst_7 [1] : vector<16x32xf32> to vector<16xf32>
    %9 = vector.shape_cast %8 : vector<16xf32> to vector<16x1xf32>
    %cst_8 = arith.constant 3.200000e+01 : f32
    %10 = vector.broadcast %cst_8 : f32 to vector<16x1xf32>
    %11 = arith.divf %9, %10 : vector<16x1xf32>
    %12 = vector.broadcast %11 : vector<16x1xf32> to vector<16x32xf32>
    %13 = arith.subf %7, %12 : vector<16x32xf32>
    %14 = arith.mulf %13, %13 : vector<16x32xf32>
    %cst_9 = arith.constant dense<0.000000e+00> : vector<16xf32>
    %15 = vector.multi_reduction <add>, %14, %cst_9 [1] : vector<16x32xf32> to vector<16xf32>
    %16 = vector.shape_cast %15 : vector<16xf32> to vector<16x1xf32>
    %cst_10 = arith.constant 3.200000e+01 : f32
    %17 = vector.broadcast %cst_10 : f32 to vector<16x1xf32>
    %18 = arith.divf %16, %17 : vector<16x1xf32>
    %19 = vector.broadcast %11 : vector<16x1xf32> to vector<16x32xf32>
    %20 = arith.subf %7, %19 : vector<16x32xf32>
    %cst_11 = arith.constant 9.99999974E-6 : f32
    %21 = vector.broadcast %cst_11 : f32 to vector<16x1xf32>
    %22 = arith.addf %18, %21 : vector<16x1xf32>
    %23 = math.rsqrt %22 : vector<16x1xf32>
    %24 = vector.broadcast %23 : vector<16x1xf32> to vector<16x32xf32>
    %25 = arith.mulf %20, %24 : vector<16x32xf32>
    %c0_12 = arith.constant 0 : index
    %c0_13 = arith.constant 0 : index
    %26 = vector.load %arg5[%c0_12, %c0_13] : memref<1x32xf32, #tpu.memory_space<vmem>>, vector<1x32xf32>
    %27 = vector.broadcast %26 : vector<1x32xf32> to vector<16x32xf32>
    %28 = arith.mulf %25, %27 : vector<16x32xf32>
    %c0_14 = arith.constant 0 : index
    %c0_15 = arith.constant 0 : index
    %29 = vector.load %arg6[%c0_14, %c0_15] : memref<1x32xf32, #tpu.memory_space<vmem>>, vector<1x32xf32>
    %30 = vector.broadcast %29 : vector<1x32xf32> to vector<16x32xf32>
    %31 = arith.addf %28, %30 : vector<16x32xf32>
    %32 = arith.truncf %31 : vector<16x32xf32> to vector<16x32xbf16>
    %c0_16 = arith.constant 0 : index
    %c0_17 = arith.constant 0 : index
    %33 = vector.load %arg7[%c0_16, %c0_17] : memref<32x64xbf16, #tpu.memory_space<vmem>>, vector<32x64xbf16>
    %cst_18 = arith.constant dense<0.000000e+00> : vector<16x64xf32>
    %34 = tpu.matmul %32, %33, %cst_18 {dimension_numbers = #tpu.dot_dimension_numbers<[1], [0], [0], [1], [0, 0, 1, 1], [], []>} : vector<16x32xbf16>, vector<32x64xbf16>, vector<16x64xf32> -> vector<16x64xf32>
    %c0_19 = arith.constant 0 : index
    %c0_20 = arith.constant 0 : index
    %35 = vector.load %arg8[%c0_19, %c0_20] : memref<1x64xf32, #tpu.memory_space<vmem>>, vector<1x64xf32>
    %36 = vector.broadcast %35 : vector<1x64xf32> to vector<16x64xf32>
    %37 = arith.addf %34, %36 : vector<16x64xf32>
    %cst_21 = arith.constant 0.000000e+00 : f32
    %38 = vector.broadcast %cst_21 : f32 to vector<16x64xf32>
    %39 = arith.maximumf %37, %38 : vector<16x64xf32>
    %40 = arith.truncf %39 : vector<16x64xf32> to vector<16x64xbf16>
    %c0_22 = arith.constant 0 : index
    %c0_23 = arith.constant 0 : index
    %41 = vector.load %arg9[%c0_22, %c0_23] : memref<64x32xbf16, #tpu.memory_space<vmem>>, vector<64x32xbf16>
    %cst_24 = arith.constant dense<0.000000e+00> : vector<16x32xf32>
    %42 = tpu.matmul %40, %41, %cst_24 {dimension_numbers = #tpu.dot_dimension_numbers<[1], [0], [0], [1], [0, 0, 1, 1], [], []>} : vector<16x64xbf16>, vector<64x32xbf16>, vector<16x32xf32> -> vector<16x32xf32>
    %c0_25 = arith.constant 0 : index
    %c0_26 = arith.constant 0 : index
    %43 = vector.load %arg10[%c0_25, %c0_26] : memref<1x32xf32, #tpu.memory_space<vmem>>, vector<1x32xf32>
    %44 = vector.broadcast %43 : vector<1x32xf32> to vector<16x32xf32>
    %45 = arith.addf %42, %44 : vector<16x32xf32>
    %46 = arith.addf %31, %45 : vector<16x32xf32>
    %cst_27 = arith.constant dense<0.000000e+00> : vector<16xf32>
    %47 = vector.multi_reduction <add>, %46, %cst_27 [1] : vector<16x32xf32> to vector<16xf32>
    %48 = vector.shape_cast %47 : vector<16xf32> to vector<16x1xf32>
    %cst_28 = arith.constant 3.200000e+01 : f32
    %49 = vector.broadcast %cst_28 : f32 to vector<16x1xf32>
    %50 = arith.divf %48, %49 : vector<16x1xf32>
    %51 = vector.broadcast %50 : vector<16x1xf32> to vector<16x32xf32>
    %52 = arith.subf %46, %51 : vector<16x32xf32>
    %53 = arith.mulf %52, %52 : vector<16x32xf32>
    %cst_29 = arith.constant dense<0.000000e+00> : vector<16xf32>
    %54 = vector.multi_reduction <add>, %53, %cst_29 [1] : vector<16x32xf32> to vector<16xf32>
    %55 = vector.shape_cast %54 : vector<16xf32> to vector<16x1xf32>
    %cst_30 = arith.constant 3.200000e+01 : f32
    %56 = vector.broadcast %cst_30 : f32 to vector<16x1xf32>
    %57 = arith.divf %55, %56 : vector<16x1xf32>
    %58 = vector.broadcast %50 : vector<16x1xf32> to vector<16x32xf32>
    %59 = arith.subf %46, %58 : vector<16x32xf32>
    %cst_31 = arith.constant 9.99999974E-6 : f32
    %60 = vector.broadcast %cst_31 : f32 to vector<16x1xf32>
    %61 = arith.addf %57, %60 : vector<16x1xf32>
    %62 = math.rsqrt %61 : vector<16x1xf32>
    %63 = vector.broadcast %62 : vector<16x1xf32> to vector<16x32xf32>
    %64 = arith.mulf %59, %63 : vector<16x32xf32>
    %c0_32 = arith.constant 0 : index
    %c0_33 = arith.constant 0 : index
    %65 = vector.load %arg11[%c0_32, %c0_33] : memref<1x32xf32, #tpu.memory_space<vmem>>, vector<1x32xf32>
    %66 = vector.broadcast %65 : vector<1x32xf32> to vector<16x32xf32>
    %67 = arith.mulf %64, %66 : vector<16x32xf32>
    %c0_34 = arith.constant 0 : index
    %c0_35 = arith.constant 0 : index
    %68 = vector.load %arg12[%c0_34, %c0_35] : memref<1x32xf32, #tpu.memory_space<vmem>>, vector<1x32xf32>
    %69 = vector.broadcast %68 : vector<1x32xf32> to vector<16x32xf32>
    %70 = arith.addf %67, %69 : vector<16x32xf32>
    %c0_36 = arith.constant 0 : index
    %c0_37 = arith.constant 0 : index
    %71 = vector.load %arg13[%c0_36, %c0_37] : memref<16x32xf32, #tpu.memory_space<vmem>>, vector<16x32xf32>
    tpu.vector_store %arg13[%c0_36, %c0_37], %70 {strides = array<i32>} : memref<16x32xf32, #tpu.memory_space<vmem>>, vector<16x32xf32>,
    return
  }
  func.func @transform_0(%arg0: i32) -> (i32, i32) {
    %c0_i32 = arith.constant 0 : i32
    %c0_i32_0 = arith.constant 0 : i32
    return %arg0, %c0_i32 : i32, i32
  }
  func.func @transform_1(%arg0: i32) -> (i32, i32) {
    %c0_i32 = arith.constant 0 : i32
    %c0_i32_0 = arith.constant 0 : i32
    return %arg0, %c0_i32 : i32, i32
  }
  func.func @transform_2(%arg0: i32) -> (i32, i32) {
    %c0_i32 = arith.constant 0 : i32
    %c0_i32_0 = arith.constant 0 : i32
    %c0_i32_1 = arith.constant 0 : i32
    return %c0_i32, %c0_i32_0 : i32, i32
  }
  func.func @transform_3(%arg0: i32) -> (i32, i32) {
    %c0_i32 = arith.constant 0 : i32
    %c0_i32_0 = arith.constant 0 : i32
    %c0_i32_1 = arith.constant 0 : i32
    return %c0_i32, %c0_i32_0 : i32, i32
  }
  func.func @transform_4(%arg0: i32) -> (i32, i32) {
    %c0_i32 = arith.constant 0 : i32
    %c0_i32_0 = arith.constant 0 : i32
    %c0_i32_1 = arith.constant 0 : i32
    return %c0_i32, %c0_i32_0 : i32, i32
  }
  func.func @transform_5(%arg0: i32) -> (i32, i32) {
    %c0_i32 = arith.constant 0 : i32
    %c0_i32_0 = arith.constant 0 : i32
    %c0_i32_1 = arith.constant 0 : i32
    return %c0_i32, %c0_i32_0 : i32, i32
  }
  func.func @transform_6(%arg0: i32) -> (i32, i32) {
    %c0_i32 = arith.constant 0 : i32
    %c0_i32_0 = arith.constant 0 : i32
    %c0_i32_1 = arith.constant 0 : i32
    return %c0_i32, %c0_i32_0 : i32, i32
  }
  func.func @transform_7(%arg0: i32) -> (i32, i32) {
    %c0_i32 = arith.constant 0 : i32
    %c0_i32_0 = arith.constant 0 : i32
    %c0_i32_1 = arith.constant 0 : i32
    return %c0_i32, %c0_i32_0 : i32, i32
  }
  func.func @transform_8(%arg0: i32) -> (i32, i32) {
    %c0_i32 = arith.constant 0 : i32
    %c0_i32_0 = arith.constant 0 : i32
    %c0_i32_1 = arith.constant 0 : i32
    return %c0_i32, %c0_i32_0 : i32, i32
  }
  func.func @transform_9(%arg0: i32) -> (i32, i32) {
    %c0_i32 = arith.constant 0 : i32
    %c0_i32_0 = arith.constant 0 : i32
    %c0_i32_1 = arith.constant 0 : i32
    return %c0_i32, %c0_i32_0 : i32, i32
  }
  func.func @transform_10(%arg0: i32) -> (i32, i32) {
    %c0_i32 = arith.constant 0 : i32
    %c0_i32_0 = arith.constant 0 : i32
    %c0_i32_1 = arith.constant 0 : i32
    return %c0_i32, %c0_i32_0 : i32, i32
  }
  func.func @transform_11(%arg0: i32) -> (i32, i32) {
    %c0_i32 = arith.constant 0 : i32
    %c0_i32_0 = arith.constant 0 : i32
    %c0_i32_1 = arith.constant 0 : i32
    return %c0_i32, %c0_i32_0 : i32, i32
  }
  func.func @transform_12(%arg0: i32) -> (i32, i32) {
    %c0_i32 = arith.constant 0 : i32
    %c0_i32_0 = arith.constant 0 : i32
    return %arg0, %c0_i32 : i32, i32
  }
}

module attributes {stable_mosaic.version = 11 : i64} {
  func.func @_attn_kernel(%arg0: i32, %arg1: i32, %arg2: memref<1x8x32xbf16, #tpu.memory_space<vmem>>, %arg3: memref<1x8x32xbf16, #tpu.memory_space<vmem>>, %arg4: memref<1x8x32xbf16, #tpu.memory_space<vmem>>, %arg5: memref<1x1x8xf32, #tpu.memory_space<vmem>>, %arg6: memref<1x8x32xbf16, #tpu.memory_space<vmem>>) attributes {dimension_semantics = [#tpu.dimension_semantics<parallel>, #tpu.dimension_semantics<parallel>], iteration_bounds = array<i64: 2, 1>, scalar_prefetch = 0 : i64, scratch_operands = 0 : i64, tpu.core_type = #tpu.core_type<tc>, window_params = [{transform_indices = @transform_0, window_bounds = array<i64: 1, 8, 32>}, {transform_indices = @transform_1, window_bounds = array<i64: 1, 8, 32>}, {transform_indices = @transform_2, window_bounds = array<i64: 1, 8, 32>}, {transform_indices = @transform_3, window_bounds = array<i64: 1, 1, 8>}, {transform_indices = @transform_4, window_bounds = array<i64: 1, 8, 32>}]} {
    %c0 = arith.constant 0 : index
    %c0_0 = arith.constant 0 : index
    %c0_1 = arith.constant 0 : index
    %0 = vector.load %arg2[%c0, %c0_0, %c0_1] : memref<1x8x32xbf16, #tpu.memory_space<vmem>>, vector<1x8x32xbf16>
    %1 = vector.shape_cast %0 : vector<1x8x32xbf16> to vector<8x32xbf16>
    %c0_2 = arith.constant 0 : index
    %c0_3 = arith.constant 0 : index
    %c0_4 = arith.constant 0 : index
    %2 = vector.load %arg3[%c0_2, %c0_3, %c0_4] : memref<1x8x32xbf16, #tpu.memory_space<vmem>>, vector<1x8x32xbf16>
    %3 = vector.shape_cast %2 : vector<1x8x32xbf16> to vector<8x32xbf16>
    %c0_5 = arith.constant 0 : index
    %c0_6 = arith.constant 0 : index
    %c0_7 = arith.constant 0 : index
    %4 = vector.load %arg4[%c0_5, %c0_6, %c0_7] : memref<1x8x32xbf16, #tpu.memory_space<vmem>>, vector<1x8x32xbf16>
    %5 = vector.shape_cast %4 : vector<1x8x32xbf16> to vector<8x32xbf16>
    %c0_8 = arith.constant 0 : index
    %c0_9 = arith.constant 0 : index
    %c0_10 = arith.constant 0 : index
    %6 = vector.load %arg5[%c0_8, %c0_9, %c0_10] : memref<1x1x8xf32, #tpu.memory_space<vmem>>, vector<1x1x8xf32>
    %7 = vector.shape_cast %6 : vector<1x1x8xf32> to vector<1x8xf32>
    %8 = vector.shape_cast %7 : vector<1x8xf32> to vector<1x8xf32>
    %9 = vector.broadcast %8 : vector<1x8xf32> to vector<8x8xf32>
    %10 = vector.extract_strided_slice %1 {offsets = [0, 0], sizes = [8, 8], strides = [1, 1]} : vector<8x32xbf16> to vector<8x8xbf16>
    %11 = vector.extract_strided_slice %3 {offsets = [0, 0], sizes = [8, 8], strides = [1, 1]} : vector<8x32xbf16> to vector<8x8xbf16>
    %cst = arith.constant dense<0.000000e+00> : vector<8x8xf32>
    %12 = tpu.matmul %10, %11, %cst {dimension_numbers = #tpu.dot_dimension_numbers<[1], [1], [0], [0], [0, 0, 1, 0], [], []>} : vector<8x8xbf16>, vector<8x8xbf16>, vector<8x8xf32> -> vector<8x8xf32>
    %13 = arith.addf %12, %9 : vector<8x8xf32>
    %cst_11 = arith.constant dense<0xFF800000> : vector<8xf32>
    %14 = vector.multi_reduction <maximumf>, %13, %cst_11 [1] : vector<8x8xf32> to vector<8xf32>
    %15 = vector.shape_cast %14 : vector<8xf32> to vector<8x1xf32>
    %16 = vector.broadcast %15 : vector<8x1xf32> to vector<8x8xf32>
    %17 = arith.subf %13, %16 : vector<8x8xf32>
    %18 = math.exp %17 : vector<8x8xf32>
    %cst_12 = arith.constant dense<0.000000e+00> : vector<8xf32>
    %19 = vector.multi_reduction <add>, %18, %cst_12 [1] : vector<8x8xf32> to vector<8xf32>
    %20 = vector.shape_cast %19 : vector<8xf32> to vector<8x1xf32>
    %21 = tpu.reciprocal %20 {approx = true} : vector<8x1xf32> -> vector<8x1xf32>
    %22 = vector.broadcast %21 : vector<8x1xf32> to vector<8x8xf32>
    %23 = arith.mulf %18, %22 : vector<8x8xf32>
    %24 = arith.truncf %23 : vector<8x8xf32> to vector<8x8xbf16>
    %25 = vector.extract_strided_slice %5 {offsets = [0, 0], sizes = [8, 8], strides = [1, 1]} : vector<8x32xbf16> to vector<8x8xbf16>
    %cst_13 = arith.constant dense<0.000000e+00> : vector<8x8xf32>
    %26 = tpu.matmul %24, %25, %cst_13 {dimension_numbers = #tpu.dot_dimension_numbers<[1], [0], [0], [1], [0, 0, 1, 1], [], []>} : vector<8x8xbf16>, vector<8x8xbf16>, vector<8x8xf32> -> vector<8x8xf32>
    %27 = arith.truncf %26 : vector<8x8xf32> to vector<8x8xbf16>
    %c0_14 = arith.constant 0 : index
    %c0_15 = arith.constant 0 : index
    %c0_16 = arith.constant 0 : index
    %28 = vector.load %arg6[%c0_14, %c0_15, %c0_16] : memref<1x8x32xbf16, #tpu.memory_space<vmem>>, vector<1x8x8xbf16>
    %29 = vector.shape_cast %28 : vector<1x8x8xbf16> to vector<8x8xbf16>
    %30 = vector.shape_cast %27 : vector<8x8xbf16> to vector<1x8x8xbf16>
    tpu.vector_store %arg6[%c0_14, %c0_15, %c0_16], %30 {strides = array<i32>} : memref<1x8x32xbf16, #tpu.memory_space<vmem>>, vector<1x8x8xbf16>,
    %31 = vector.extract_strided_slice %1 {offsets = [0, 8], sizes = [8, 8], strides = [1, 1]} : vector<8x32xbf16> to vector<8x8xbf16>
    %32 = vector.extract_strided_slice %3 {offsets = [0, 8], sizes = [8, 8], strides = [1, 1]} : vector<8x32xbf16> to vector<8x8xbf16>
    %cst_17 = arith.constant dense<0.000000e+00> : vector<8x8xf32>
    %33 = tpu.matmul %31, %32, %cst_17 {dimension_numbers = #tpu.dot_dimension_numbers<[1], [1], [0], [0], [0, 0, 1, 0], [], []>} : vector<8x8xbf16>, vector<8x8xbf16>, vector<8x8xf32> -> vector<8x8xf32>
    %34 = arith.addf %33, %9 : vector<8x8xf32>
    %cst_18 = arith.constant dense<0xFF800000> : vector<8xf32>
    %35 = vector.multi_reduction <maximumf>, %34, %cst_18 [1] : vector<8x8xf32> to vector<8xf32>
    %36 = vector.shape_cast %35 : vector<8xf32> to vector<8x1xf32>
    %37 = vector.broadcast %36 : vector<8x1xf32> to vector<8x8xf32>
    %38 = arith.subf %34, %37 : vector<8x8xf32>
    %39 = math.exp %38 : vector<8x8xf32>
    %cst_19 = arith.constant dense<0.000000e+00> : vector<8xf32>
    %40 = vector.multi_reduction <add>, %39, %cst_19 [1] : vector<8x8xf32> to vector<8xf32>
    %41 = vector.shape_cast %40 : vector<8xf32> to vector<8x1xf32>
    %42 = tpu.reciprocal %41 {approx = true} : vector<8x1xf32> -> vector<8x1xf32>
    %43 = vector.broadcast %42 : vector<8x1xf32> to vector<8x8xf32>
    %44 = arith.mulf %39, %43 : vector<8x8xf32>
    %45 = arith.truncf %44 : vector<8x8xf32> to vector<8x8xbf16>
    %46 = vector.extract_strided_slice %5 {offsets = [0, 8], sizes = [8, 8], strides = [1, 1]} : vector<8x32xbf16> to vector<8x8xbf16>
    %cst_20 = arith.constant dense<0.000000e+00> : vector<8x8xf32>
    %47 = tpu.matmul %45, %46, %cst_20 {dimension_numbers = #tpu.dot_dimension_numbers<[1], [0], [0], [1], [0, 0, 1, 1], [], []>} : vector<8x8xbf16>, vector<8x8xbf16>, vector<8x8xf32> -> vector<8x8xf32>
    %48 = arith.truncf %47 : vector<8x8xf32> to vector<8x8xbf16>
    %c0_21 = arith.constant 0 : index
    %c0_22 = arith.constant 0 : index
    %c8 = arith.constant 8 : index
    %49 = vector.load %arg6[%c0_21, %c0_22, %c8] : memref<1x8x32xbf16, #tpu.memory_space<vmem>>, vector<1x8x8xbf16>
    %50 = vector.shape_cast %49 : vector<1x8x8xbf16> to vector<8x8xbf16>
    %51 = vector.shape_cast %48 : vector<8x8xbf16> to vector<1x8x8xbf16>
    tpu.vector_store %arg6[%c0_21, %c0_22, %c8], %51 {strides = array<i32>} : memref<1x8x32xbf16, #tpu.memory_space<vmem>>, vector<1x8x8xbf16>,
    %52 = vector.extract_strided_slice %1 {offsets = [0, 16], sizes = [8, 8], strides = [1, 1]} : vector<8x32xbf16> to vector<8x8xbf16>
    %53 = vector.extract_strided_slice %3 {offsets = [0, 16], sizes = [8, 8], strides = [1, 1]} : vector<8x32xbf16> to vector<8x8xbf16>
    %cst_23 = arith.constant dense<0.000000e+00> : vector<8x8xf32>
    %54 = tpu.matmul %52, %53, %cst_23 {dimension_numbers = #tpu.dot_dimension_numbers<[1], [1], [0], [0], [0, 0, 1, 0], [], []>} : vector<8x8xbf16>, vector<8x8xbf16>, vector<8x8xf32> -> vector<8x8xf32>
    %55 = arith.addf %54, %9 : vector<8x8xf32>
    %cst_24 = arith.constant dense<0xFF800000> : vector<8xf32>
    %56 = vector.multi_reduction <maximumf>, %55, %cst_24 [1] : vector<8x8xf32> to vector<8xf32>
    %57 = vector.shape_cast %56 : vector<8xf32> to vector<8x1xf32>
    %58 = vector.broadcast %57 : vector<8x1xf32> to vector<8x8xf32>
    %59 = arith.subf %55, %58 : vector<8x8xf32>
    %60 = math.exp %59 : vector<8x8xf32>
    %cst_25 = arith.constant dense<0.000000e+00> : vector<8xf32>
    %61 = vector.multi_reduction <add>, %60, %cst_25 [1] : vector<8x8xf32> to vector<8xf32>
    %62 = vector.shape_cast %61 : vector<8xf32> to vector<8x1xf32>
    %63 = tpu.reciprocal %62 {approx = true} : vector<8x1xf32> -> vector<8x1xf32>
    %64 = vector.broadcast %63 : vector<8x1xf32> to vector<8x8xf32>
    %65 = arith.mulf %60, %64 : vector<8x8xf32>
    %66 = arith.truncf %65 : vector<8x8xf32> to vector<8x8xbf16>
    %67 = vector.extract_strided_slice %5 {offsets = [0, 16], sizes = [8, 8], strides = [1, 1]} : vector<8x32xbf16> to vector<8x8xbf16>
    %cst_26 = arith.constant dense<0.000000e+00> : vector<8x8xf32>
    %68 = tpu.matmul %66, %67, %cst_26 {dimension_numbers = #tpu.dot_dimension_numbers<[1], [0], [0], [1], [0, 0, 1, 1], [], []>} : vector<8x8xbf16>, vector<8x8xbf16>, vector<8x8xf32> -> vector<8x8xf32>
    %69 = arith.truncf %68 : vector<8x8xf32> to vector<8x8xbf16>
    %c0_27 = arith.constant 0 : index
    %c0_28 = arith.constant 0 : index
    %c16 = arith.constant 16 : index
    %70 = vector.load %arg6[%c0_27, %c0_28, %c16] : memref<1x8x32xbf16, #tpu.memory_space<vmem>>, vector<1x8x8xbf16>
    %71 = vector.shape_cast %70 : vector<1x8x8xbf16> to vector<8x8xbf16>
    %72 = vector.shape_cast %69 : vector<8x8xbf16> to vector<1x8x8xbf16>
    tpu.vector_store %arg6[%c0_27, %c0_28, %c16], %72 {strides = array<i32>} : memref<1x8x32xbf16, #tpu.memory_space<vmem>>, vector<1x8x8xbf16>,
    %73 = vector.extract_strided_slice %1 {offsets = [0, 24], sizes = [8, 8], strides = [1, 1]} : vector<8x32xbf16> to vector<8x8xbf16>
    %74 = vector.extract_strided_slice %3 {offsets = [0, 24], sizes = [8, 8], strides = [1, 1]} : vector<8x32xbf16> to vector<8x8xbf16>
    %cst_29 = arith.constant dense<0.000000e+00> : vector<8x8xf32>
    %75 = tpu.matmul %73, %74, %cst_29 {dimension_numbers = #tpu.dot_dimension_numbers<[1], [1], [0], [0], [0, 0, 1, 0], [], []>} : vector<8x8xbf16>, vector<8x8xbf16>, vector<8x8xf32> -> vector<8x8xf32>
    %76 = arith.addf %75, %9 : vector<8x8xf32>
    %cst_30 = arith.constant dense<0xFF800000> : vector<8xf32>
    %77 = vector.multi_reduction <maximumf>, %76, %cst_30 [1] : vector<8x8xf32> to vector<8xf32>
    %78 = vector.shape_cast %77 : vector<8xf32> to vector<8x1xf32>
    %79 = vector.broadcast %78 : vector<8x1xf32> to vector<8x8xf32>
    %80 = arith.subf %76, %79 : vector<8x8xf32>
    %81 = math.exp %80 : vector<8x8xf32>
    %cst_31 = arith.constant dense<0.000000e+00> : vector<8xf32>
    %82 = vector.multi_reduction <add>, %81, %cst_31 [1] : vector<8x8xf32> to vector<8xf32>
    %83 = vector.shape_cast %82 : vector<8xf32> to vector<8x1xf32>
    %84 = tpu.reciprocal %83 {approx = true} : vector<8x1xf32> -> vector<8x1xf32>
    %85 = vector.broadcast %84 : vector<8x1xf32> to vector<8x8xf32>
    %86 = arith.mulf %81, %85 : vector<8x8xf32>
    %87 = arith.truncf %86 : vector<8x8xf32> to vector<8x8xbf16>
    %88 = vector.extract_strided_slice %5 {offsets = [0, 24], sizes = [8, 8], strides = [1, 1]} : vector<8x32xbf16> to vector<8x8xbf16>
    %cst_32 = arith.constant dense<0.000000e+00> : vector<8x8xf32>
    %89 = tpu.matmul %87, %88, %cst_32 {dimension_numbers = #tpu.dot_dimension_numbers<[1], [0], [0], [1], [0, 0, 1, 1], [], []>} : vector<8x8xbf16>, vector<8x8xbf16>, vector<8x8xf32> -> vector<8x8xf32>
    %90 = arith.truncf %89 : vector<8x8xf32> to vector<8x8xbf16>
    %c0_33 = arith.constant 0 : index
    %c0_34 = arith.constant 0 : index
    %c24 = arith.constant 24 : index
    %91 = vector.load %arg6[%c0_33, %c0_34, %c24] : memref<1x8x32xbf16, #tpu.memory_space<vmem>>, vector<1x8x8xbf16>
    %92 = vector.shape_cast %91 : vector<1x8x8xbf16> to vector<8x8xbf16>
    %93 = vector.shape_cast %90 : vector<8x8xbf16> to vector<1x8x8xbf16>
    tpu.vector_store %arg6[%c0_33, %c0_34, %c24], %93 {strides = array<i32>} : memref<1x8x32xbf16, #tpu.memory_space<vmem>>, vector<1x8x8xbf16>,
    return
  }
  func.func @transform_0(%arg0: i32, %arg1: i32) -> (i32, i32, i32) {
    %c0_i32 = arith.constant 0 : i32
    %c0_i32_0 = arith.constant 0 : i32
    return %arg0, %arg1, %c0_i32 : i32, i32, i32
  }
  func.func @transform_1(%arg0: i32, %arg1: i32) -> (i32, i32, i32) {
    %c0_i32 = arith.constant 0 : i32
    %c0_i32_0 = arith.constant 0 : i32
    %c0_i32_1 = arith.constant 0 : i32
    return %arg0, %c0_i32, %c0_i32_0 : i32, i32, i32
  }
  func.func @transform_2(%arg0: i32, %arg1: i32) -> (i32, i32, i32) {
    %c0_i32 = arith.constant 0 : i32
    %c0_i32_0 = arith.constant 0 : i32
    %c0_i32_1 = arith.constant 0 : i32
    return %arg0, %c0_i32, %c0_i32_0 : i32, i32, i32
  }
  func.func @transform_3(%arg0: i32, %arg1: i32) -> (i32, i32, i32) {
    %c0_i32 = arith.constant 0 : i32
    %c0_i32_0 = arith.constant 0 : i32
    %c0_i32_1 = arith.constant 0 : i32
    return %arg0, %c0_i32, %c0_i32_0 : i32, i32, i32
  }
  func.func @transform_4(%arg0: i32, %arg1: i32) -> (i32, i32, i32) {
    %c0_i32 = arith.constant 0 : i32
    %c0_i32_0 = arith.constant 0 : i32
    return %arg0, %arg1, %c0_i32 : i32, i32, i32
  }
}

</mosaic_0001>

<llo_original>
// kernel: vision_language_encoder.8
$region0: #{vision_language_encoder.8}
  #allocation0 [shape = 'u32[]', space=smem, size = 0x4, offset = 0x4, fixed_abs, tag = 'smem constant byte address 0x4 - core index']
  #allocation1 [shape = 'u32[72,128]{1,0:T(1,128)}', space=vmem, size = 0x9000, scoped, tag = 'internal scratch']
  %s0 = inlined_call_operand.vmem [shape: bf16[16,32], index: 0, kind: input, shape index: {}]
  %s1 = inlined_call_operand.vmem [shape: f32[16,32], index: 1, kind: input, shape index: {}]
  %s2 = inlined_call_operand.vmem [shape: bf16[32,32], index: 2, kind: input, shape index: {}]
  %s3 = inlined_call_operand.vmem [shape: f32[1,32], index: 3, kind: input, shape index: {}]
  %s4 = inlined_call_operand.vmem [shape: f32[1,32], index: 4, kind: input, shape index: {}]
  %s5 = inlined_call_operand.vmem [shape: f32[1,32], index: 5, kind: input, shape index: {}]
  %s6 = inlined_call_operand.vmem [shape: bf16[32,64], index: 6, kind: input, shape index: {}]
  %s7 = inlined_call_operand.vmem [shape: f32[1,64], index: 7, kind: input, shape index: {}]
  %s8 = inlined_call_operand.vmem [shape: bf16[64,32], index: 8, kind: input, shape index: {}]
  %s9 = inlined_call_operand.vmem [shape: f32[1,32], index: 9, kind: input, shape index: {}]
  %s10 = inlined_call_operand.vmem [shape: f32[1,32], index: 10, kind: input, shape index: {}]
  %s11 = inlined_call_operand.vmem [shape: f32[1,32], index: 11, kind: input, shape index: {}]
  %s12 = inlined_call_operand.vmem [shape: f32[16,32], index: 12, kind: output, shape index: {}]
  %s13 = sld [smem:[#allocation0]]
  $region58: #{vision_language_encoder.8} parent=0
    _
  %s15 = ssub.s32 1, %s13
  %s16 = scalar_select 0, %s15, %s13
  // Predicated region
  $region2: #{vision_language_encoder.8} parent=0 // pred_check
    _
  $region3: #{vision_language_encoder.8} parent=0 // pred_check_branch
    %18 = sbr.rel (0) target = $region5
  $region4: #{vision_language_encoder.8} parent=0 // pred_region
    _
  $region5: #{vision_language_encoder.8} parent=0 // pred_fallthru
    _
  // Predicated region
  $region6: #{vision_language_encoder.8} parent=0 // pred_check
    _
  $region7: #{vision_language_encoder.8} parent=0 // pred_check_branch
    %20 = sbr.rel (0) target = $region9
  $region8: #{vision_language_encoder.8} parent=0 // pred_region
    _
  $region9: #{vision_language_encoder.8} parent=0 // pred_fallthru
    _
  // Predicated region
  $region10: #{vision_language_encoder.8} parent=0 // pred_check
    _
  $region11: #{vision_language_encoder.8} parent=0 // pred_check_branch
    %22 = sbr.rel (0) target = $region13
  $region12: #{vision_language_encoder.8} parent=0 // pred_region
    _
  $region13: #{vision_language_encoder.8} parent=0 // pred_fallthru
    _
  // Predicated region
  $region14: #{vision_language_encoder.8} parent=0 // pred_check
    _
  $region15: #{vision_language_encoder.8} parent=0 // pred_check_branch
    %24 = sbr.rel (0) target = $region17
  $region16: #{vision_language_encoder.8} parent=0 // pred_region
    _
  $region17: #{vision_language_encoder.8} parent=0 // pred_fallthru
    _
  // Predicated region
  $region18: #{vision_language_encoder.8} parent=0 // pred_check
    _
  $region19: #{vision_language_encoder.8} parent=0 // pred_check_branch
    %26 = sbr.rel (0) target = $region21
  $region20: #{vision_language_encoder.8} parent=0 // pred_region
    _
  $region21: #{vision_language_encoder.8} parent=0 // pred_fallthru
    _
  // Predicated region
  $region22: #{vision_language_encoder.8} parent=0 // pred_check
    _
  $region23: #{vision_language_encoder.8} parent=0 // pred_check_branch
    %28 = sbr.rel (0) target = $region25
  $region24: #{vision_language_encoder.8} parent=0 // pred_region
    _
  $region25: #{vision_language_encoder.8} parent=0 // pred_fallthru
    _
  // Predicated region
  $region26: #{vision_language_encoder.8} parent=0 // pred_check
    _
  $region27: #{vision_language_encoder.8} parent=0 // pred_check_branch
    %30 = sbr.rel (0) target = $region29
  $region28: #{vision_language_encoder.8} parent=0 // pred_region
    _
  $region29: #{vision_language_encoder.8} parent=0 // pred_fallthru
    _
  // Predicated region
  $region30: #{vision_language_encoder.8} parent=0 // pred_check
    _
  $region31: #{vision_language_encoder.8} parent=0 // pred_check_branch
    %32 = sbr.rel (0) target = $region33
  $region32: #{vision_language_encoder.8} parent=0 // pred_region
    _
  $region33: #{vision_language_encoder.8} parent=0 // pred_fallthru
    _
  // Predicated region
  $region34: #{vision_language_encoder.8} parent=0 // pred_check
    _
  $region35: #{vision_language_encoder.8} parent=0 // pred_check_branch
    %34 = sbr.rel (0) target = $region37
  $region36: #{vision_language_encoder.8} parent=0 // pred_region
    _
  $region37: #{vision_language_encoder.8} parent=0 // pred_fallthru
    _
  // Predicated region
  $region38: #{vision_language_encoder.8} parent=0 // pred_check
    _
  $region39: #{vision_language_encoder.8} parent=0 // pred_check_branch
    %36 = sbr.rel (0) target = $region41
  $region40: #{vision_language_encoder.8} parent=0 // pred_region
    _
  $region41: #{vision_language_encoder.8} parent=0 // pred_fallthru
    _
  // Predicated region
  $region42: #{vision_language_encoder.8} parent=0 // pred_check
    _
  $region43: #{vision_language_encoder.8} parent=0 // pred_check_branch
    %38 = sbr.rel (0) target = $region45
  $region44: #{vision_language_encoder.8} parent=0 // pred_region
    _
  $region45: #{vision_language_encoder.8} parent=0 // pred_fallthru
    _
  // Predicated region
  $region46: #{vision_language_encoder.8} parent=0 // pred_check
    _
  $region47: #{vision_language_encoder.8} parent=0 // pred_check_branch
    %40 = sbr.rel (0) target = $region49
  $region48: #{vision_language_encoder.8} parent=0 // pred_region
    _
  $region49: #{vision_language_encoder.8} parent=0 // pred_fallthru
    _
  %v42 = vld [vmem:[%s0] sm:$0xf]
  %v43 = vld [vmem:[%s0 + $0x4] sm:$0xf]
  %v44 = vld [vmem:[%s2] sm:$0xf]
  %v45 = vld [vmem:[%s2 + $0x4] sm:$0xf]
  %v46 = vld [vmem:[%s2 + $0x8] sm:$0xf]
  %v47 = vld [vmem:[%s2 + $0xc] sm:$0xf]
  %v48 = vld [vmem:[%s3] sm:$0x1]
  %v50 = vperm.slane %v48, 0
  %v54 = vunpack.c.l.b16 %v42
  %v55 = vunpack.c.l.b16 %v43
  %v56 = vpack.c.b16 %v55, %v54
  %v61 = vunpack.c.l.b16 %v44
  %v62 = vunpack.c.l.b16 %v45
  %v63 = vunpack.c.l.b16 %v46
  %v64 = vunpack.c.l.b16 %v47
  %v65 = vpack.c.b16 %v62, %v61
  %v66 = vpack.c.b16 %v64, %v63
  %vm69 = vcmask 261120
  %v71 = vsel %vm69, %v56, 0
  %73 = vmatpush.bf16.msra.mxu0 0
  %74 = vmatpush.bf16.msra.mxu0 0
  %75 = vmatpush.bf16.msra.mxu0 0
  %76 = vmatpush.bf16.msra.mxu0 0
  %77 = vmatpush.bf16.msra.mxu0 0
  %78 = vmatpush.bf16.msra.mxu0 0
  %79 = vmatpush.bf16.msra.mxu0 %v66
  %80 = vmatpush.bf16.msra.mxu0 %v65
  %81 = vmatmul.bf16.gmra.mxu0 %v71
  %v82 = vpop.f32.mrf.mxu0
  %v83 = vadd.f32 %v50, %v82
  %v84 = vpop.f32.mrf.mxu0
  %v85 = vadd.f32 %v50, %v84
  %86 = vdwg.mxu0
  %v87 = vld [vmem:[%s1] sm:$0xff]
  %v88 = vld [vmem:[%s1 + $0x8] sm:$0xff]
  %v89 = vadd.f32 %v87, %v83
  %v90 = vadd.f32 %v88, %v85
  %v91 = vsel %vm69, %v89, 0.0
  %92 = vadd.xlane.f32.xlu0 %v91
  %v93 = vpop.xlane.xlu0 %92
  %v94 = vsel %vm69, %v90, 0.0
  %95 = vadd.xlane.f32.xlu0 %v94
  %v96 = vpop.xlane.xlu0 %95
  %v97 = vrcp.pop 32.0
  %v98 = vmul.f32 32.0, %v97
  %v99 = vsub.f32 1.0, %v98
  %v100 = vmul.f32 %v97, %v99
  %v101 = vadd.f32 %v97, %v100
  %vm102 = vweird.f32 %v97
  %v103 = vsel %vm102, %v97, %v101
  %v104 = vmul.f32 %v93, %v103
  %v105 = vmul.f32 %v96, %v103
  %v106 = vsub.f32 %v89, %v104
  %v107 = vsub.f32 %v90, %v105
  %v108 = vmul.f32 %v106, %v106
  %v109 = vmul.f32 %v107, %v107
  %v110 = vsel %vm69, %v108, 0.0
  %111 = vadd.xlane.f32.xlu0 %v110
  %v112 = vpop.xlane.xlu0 %111
  %v113 = vsel %vm69, %v109, 0.0
  %114 = vadd.xlane.f32.xlu0 %v113
  %v115 = vpop.xlane.xlu0 %114
  %v116 = vmul.f32 %v112, %v103
  %v117 = vmul.f32 %v115, %v103
  %v118 = vadd.f32 %v116, 1e-05
  %v119 = vadd.f32 %v117, 1e-05
  %v120 = vrsqrt.pop %v118
  %v121 = vmul.f32 %v120, %v118
  %v122 = vmul.f32 %v121, %v120
  %v123 = vmul.f32 0.5, %v122
  %v124 = vsub.f32 1.5, %v123
  %v125 = vmul.f32 %v120, %v124
  %vm126 = vweird.f32 %v118
  %vm127 = vweird.f32 %v120
  %vm128 = vmor %vm126, %vm127
  %v129 = vsel %vm128, %v120, %v125
  %v130 = vrsqrt.pop %v119
  %v131 = vmul.f32 %v130, %v119
  %v132 = vmul.f32 %v131, %v130
  %v133 = vmul.f32 0.5, %v132
  %v134 = vsub.f32 1.5, %v133
  %v135 = vmul.f32 %v130, %v134
  %vm136 = vweird.f32 %v119
  %vm137 = vweird.f32 %v130
  %vm138 = vmor %vm136, %vm137
  %v139 = vsel %vm138, %v130, %v135
  %v140 = vmul.f32 %v106, %v129
  %v141 = vmul.f32 %v107, %v139
  %v142 = vld [vmem:[%s4] sm:$0x1]
  %v144 = vperm.slane %v142, 0
  %v146 = vmul.f32 %v140, %v144
  %v147 = vmul.f32 %v141, %v144
  %v148 = vld [vmem:[%s5] sm:$0x1]
  %v150 = vperm.slane %v148, 0
  %v152 = vadd.f32 %v146, %v150
  %v153 = vadd.f32 %v147, %v150
  %v154 = vpack.c.bf16 %v153, %v152
  %v155 = vld [vmem:[%s6] sm:$0xf]
  %v156 = vld [vmem:[%s6 + $0x4] sm:$0xf]
  %v157 = vld [vmem:[%s6 + $0x8] sm:$0xf]
  %v158 = vld [vmem:[%s6 + $0xc] sm:$0xf]
  %v159 = vld [vmem:[%s7] sm:$0x1]
  %v161 = vperm.slane %v159, 0
  %v167 = vunpack.c.l.b16 %v155
  %v168 = vunpack.c.l.b16 %v156
  %v169 = vunpack.c.l.b16 %v157
  %v170 = vunpack.c.l.b16 %v158
  %v171 = vpack.c.b16 %v168, %v167
  %v172 = vpack.c.b16 %v170, %v169
  %v176 = vsel %vm69, %v154, 0
  %178 = vmatpush.bf16.msra.mxu0 0
  %179 = vmatpush.bf16.msra.mxu0 0
  %180 = vmatpush.bf16.msra.mxu0 0
  %181 = vmatpush.bf16.msra.mxu0 0
  %182 = vmatpush.bf16.msra.mxu0 0
  %183 = vmatpush.bf16.msra.mxu0 0
  %184 = vmatpush.bf16.msra.mxu0 %v172
  %185 = vmatpush.bf16.msra.mxu0 %v171
  %186 = vmatmul.bf16.gmra.mxu0 %v176
  %v187 = vpop.f32.mrf.mxu0
  %v188 = vadd.f32 %v161, %v187
  %v189 = vpop.f32.mrf.mxu0
  %v190 = vadd.f32 %v161, %v189
  %191 = vdwg.mxu0
  %v192 = vmax.f32 %v188, 0.0
  %v193 = vmax.f32 %v190, 0.0
  %v194 = vpack.c.bf16 %v193, %v192
  %v195 = vld [vmem:[%s8] sm:$0xf]
  %v196 = vld [vmem:[%s8 + $0x4] sm:$0xf]
  %v197 = vld [vmem:[%s8 + $0x8] sm:$0xf]
  %v198 = vld [vmem:[%s8 + $0xc] sm:$0xf]
  %v199 = vld [vmem:[%s8 + $0x10] sm:$0xf]
  %v200 = vld [vmem:[%s8 + $0x14] sm:$0xf]
  %v201 = vld [vmem:[%s8 + $0x18] sm:$0xf]
  %v202 = vld [vmem:[%s8 + $0x1c] sm:$0xf]
  %v203 = vld [vmem:[%s9] sm:$0x1]
  %v205 = vperm.slane %v203, 0
  %v215 = vunpack.c.l.b16 %v195
  %v216 = vunpack.c.l.b16 %v196
  %v217 = vunpack.c.l.b16 %v197
  %v218 = vunpack.c.l.b16 %v198
  %v219 = vunpack.c.l.b16 %v199
  %v220 = vunpack.c.l.b16 %v200
  %v221 = vunpack.c.l.b16 %v201
  %v222 = vunpack.c.l.b16 %v202
  %v223 = vpack.c.b16 %v216, %v215
  %v224 = vpack.c.b16 %v218, %v217
  %v225 = vpack.c.b16 %v220, %v219
  %v226 = vpack.c.b16 %v222, %v221
  %vm231 = vcmask 523264
  %v233 = vsel %vm231, %v194, 0
  %235 = vmatpush.bf16.msra.mxu0 0
  %236 = vmatpush.bf16.msra.mxu0 0
  %237 = vmatpush.bf16.msra.mxu0 0
  %238 = vmatpush.bf16.msra.mxu0 0
  %239 = vmatpush.bf16.msra.mxu0 %v226
  %240 = vmatpush.bf16.msra.mxu0 %v225
  %241 = vmatpush.bf16.msra.mxu0 %v224
  %242 = vmatpush.bf16.msra.mxu0 %v223
  %243 = vmatmul.bf16.gmra.mxu0 %v233
  %v244 = vpop.f32.mrf.mxu0
  %v245 = vadd.f32 %v205, %v244
  %v246 = vpop.f32.mrf.mxu0
  %v247 = vadd.f32 %v205, %v246
  %248 = vdwg.mxu0
  %v249 = vadd.f32 %v152, %v245
  %v250 = vadd.f32 %v153, %v247
  %v251 = vsel %vm69, %v249, 0.0
  %252 = vadd.xlane.f32.xlu0 %v251
  %v253 = vpop.xlane.xlu0 %252
  %v254 = vsel %vm69, %v250, 0.0
  %255 = vadd.xlane.f32.xlu0 %v254
  %v256 = vpop.xlane.xlu0 %255
  %v257 = vmul.f32 %v253, %v103
  %v258 = vmul.f32 %v256, %v103
  %v259 = vsub.f32 %v249, %v257
  %v260 = vsub.f32 %v250, %v258
  %v261 = vmul.f32 %v259, %v259
  %v262 = vmul.f32 %v260, %v260
  %v263 = vsel %vm69, %v261, 0.0
  %264 = vadd.xlane.f32.xlu0 %v263
  %v265 = vpop.xlane.xlu0 %264
  %v266 = vsel %vm69, %v262, 0.0
  %267 = vadd.xlane.f32.xlu0 %v266
  %v268 = vpop.xlane.xlu0 %267
  %v269 = vmul.f32 %v265, %v103
  %v270 = vmul.f32 %v268, %v103
  %v271 = vadd.f32 %v269, 1e-05
  %v272 = vadd.f32 %v270, 1e-05
  %v273 = vrsqrt.pop %v271
  %v274 = vmul.f32 %v273, %v271
  %v275 = vmul.f32 %v274, %v273
  %v276 = vmul.f32 0.5, %v275
  %v277 = vsub.f32 1.5, %v276
  %v278 = vmul.f32 %v273, %v277
  %vm279 = vweird.f32 %v271
  %vm280 = vweird.f32 %v273
  %vm281 = vmor %vm279, %vm280
  %v282 = vsel %vm281, %v273, %v278
  %v283 = vrsqrt.pop %v272
  %v284 = vmul.f32 %v283, %v272
  %v285 = vmul.f32 %v284, %v283
  %v286 = vmul.f32 0.5, %v285
  %v287 = vsub.f32 1.5, %v286
  %v288 = vmul.f32 %v283, %v287
  %vm289 = vweird.f32 %v272
  %vm290 = vweird.f32 %v283
  %vm291 = vmor %vm289, %vm290
  %v292 = vsel %vm291, %v283, %v288
  %v293 = vmul.f32 %v259, %v282
  %v294 = vmul.f32 %v260, %v292
  %v295 = vld [vmem:[%s10] sm:$0x1]
  %v297 = vperm.slane %v295, 0
  %v299 = vmul.f32 %v293, %v297
  %v300 = vmul.f32 %v294, %v297
  %v301 = vld [vmem:[%s11] sm:$0x1]
  %v303 = vperm.slane %v301, 0
  %v305 = vadd.f32 %v299, %v303
  %v306 = vadd.f32 %v300, %v303
  %307 = vst.msk [vmem:[%s12] sm:$0xff] %vm69, %v305
  %308 = vst.msk [vmem:[%s12 + $0x8] sm:$0xff] %vm69, %v306
  // Predicated region
  $region50: #{vision_language_encoder.8} parent=0 // pred_check
    _
  $region51: #{vision_language_encoder.8} parent=0 // pred_check_branch
    %310 = sbr.rel (0) target = $region53
  $region52: #{vision_language_encoder.8} parent=0 // pred_region
    _
  $region53: #{vision_language_encoder.8} parent=0 // pred_fallthru
    _
  // Predicated region
  $region54: #{vision_language_encoder.8} parent=0 // pred_check
    _
  $region55: #{vision_language_encoder.8} parent=0 // pred_check_branch
    %312 = sbr.rel (0) target = $region57
  $region56: #{vision_language_encoder.8} parent=0 // pred_region
    _
  $region57: #{vision_language_encoder.8} parent=0 // pred_fallthru
    _

// kernel: vision_language_encoder.6
$region0: #{vision_language_encoder.6}
  #allocation0 [shape = 'u32[]', space=smem, size = 0x4, offset = 0x4, fixed_abs, tag = 'smem constant byte address 0x4 - core index']
  #allocation1 [shape = 'u32[72,128]{1,0:T(1,128)}', space=vmem, size = 0x9000, scoped, tag = 'internal scratch']
  %s0 = inlined_call_operand.vmem [shape: f32[16,32], index: 0, kind: input, shape index: {}]
  %s1 = inlined_call_operand.vmem [shape: f32[16,32], index: 1, kind: input, shape index: {}]
  %s2 = inlined_call_operand.vmem [shape: bf16[32,64], index: 2, kind: input, shape index: {}]
  %s3 = inlined_call_operand.vmem [shape: f32[1,64], index: 3, kind: input, shape index: {}]
  %s4 = inlined_call_operand.vmem [shape: bf16[32,32], index: 4, kind: input, shape index: {}]
  %s5 = inlined_call_operand.vmem [shape: f32[1,32], index: 5, kind: input, shape index: {}]
  %s6 = inlined_call_operand.vmem [shape: bf16[16,32], index: 6, kind: output, shape index: {0}]
  %s7 = inlined_call_operand.vmem [shape: bf16[16,32], index: 7, kind: output, shape index: {1}]
  %s8 = inlined_call_operand.vmem [shape: bf16[16,32], index: 8, kind: output, shape index: {2}]
  %9 = xla_tuple %s6, %s7, %s8
  %s10 = sld [smem:[#allocation0]]
  $region50: #{vision_language_encoder.6} parent=0
    _
  %s12 = ssub.s32 1, %s10
  %s13 = scalar_select 0, %s12, %s10
  // Predicated region
  $region2: #{vision_language_encoder.6} parent=0 // pred_check
    _
  $region3: #{vision_language_encoder.6} parent=0 // pred_check_branch
    %15 = sbr.rel (0) target = $region5
  $region4: #{vision_language_encoder.6} parent=0 // pred_region
    _
  $region5: #{vision_language_encoder.6} parent=0 // pred_fallthru
    _
  // Predicated region
  $region6: #{vision_language_encoder.6} parent=0 // pred_check
    _
  $region7: #{vision_language_encoder.6} parent=0 // pred_check_branch
    %17 = sbr.rel (0) target = $region9
  $region8: #{vision_language_encoder.6} parent=0 // pred_region
    _
  $region9: #{vision_language_encoder.6} parent=0 // pred_fallthru
    _
  // Predicated region
  $region10: #{vision_language_encoder.6} parent=0 // pred_check
    _
  $region11: #{vision_language_encoder.6} parent=0 // pred_check_branch
    %19 = sbr.rel (0) target = $region13
  $region12: #{vision_language_encoder.6} parent=0 // pred_region
    _
  $region13: #{vision_language_encoder.6} parent=0 // pred_fallthru
    _
  // Predicated region
  $region14: #{vision_language_encoder.6} parent=0 // pred_check
    _
  $region15: #{vision_language_encoder.6} parent=0 // pred_check_branch
    %21 = sbr.rel (0) target = $region17
  $region16: #{vision_language_encoder.6} parent=0 // pred_region
    _
  $region17: #{vision_language_encoder.6} parent=0 // pred_fallthru
    _
  // Predicated region
  $region18: #{vision_language_encoder.6} parent=0 // pred_check
    _
  $region19: #{vision_language_encoder.6} parent=0 // pred_check_branch
    %23 = sbr.rel (0) target = $region21
  $region20: #{vision_language_encoder.6} parent=0 // pred_region
    _
  $region21: #{vision_language_encoder.6} parent=0 // pred_fallthru
    _
  // Predicated region
  $region22: #{vision_language_encoder.6} parent=0 // pred_check
    _
  $region23: #{vision_language_encoder.6} parent=0 // pred_check_branch
    %25 = sbr.rel (0) target = $region25
  $region24: #{vision_language_encoder.6} parent=0 // pred_region
    _
  $region25: #{vision_language_encoder.6} parent=0 // pred_fallthru
    _
  %v27 = vld [vmem:[%s0] sm:$0xff]
  %v28 = vld [vmem:[%s0 + $0x8] sm:$0xff]
  %v29 = vld [vmem:[%s1] sm:$0xff]
  %v30 = vld [vmem:[%s1 + $0x8] sm:$0xff]
  %v31 = vadd.f32 %v27, %v29
  %v32 = vadd.f32 %v28, %v30
  %v33 = vpack.c.bf16 %v32, %v31
  %v34 = vld [vmem:[%s2] sm:$0xf]
  %v35 = vld [vmem:[%s2 + $0x4] sm:$0xf]
  %v36 = vld [vmem:[%s2 + $0x8] sm:$0xf]
  %v37 = vld [vmem:[%s2 + $0xc] sm:$0xf]
  %v38 = vld [vmem:[%s3] sm:$0x1]
  %v40 = vperm.slane %v38, 0
  %v46 = vunpack.c.l.b16 %v34
  %v47 = vunpack.c.l.b16 %v35
  %v48 = vunpack.c.l.b16 %v36
  %v49 = vunpack.c.l.b16 %v37
  %v50 = vpack.c.b16 %v47, %v46
  %v51 = vpack.c.b16 %v49, %v48
  %vm54 = vcmask 261120
  %v56 = vsel %vm54, %v33, 0
  %58 = vmatpush.bf16.msra.mxu0 0
  %59 = vmatpush.bf16.msra.mxu0 0
  %60 = vmatpush.bf16.msra.mxu0 0
  %61 = vmatpush.bf16.msra.mxu0 0
  %62 = vmatpush.bf16.msra.mxu0 0
  %63 = vmatpush.bf16.msra.mxu0 0
  %64 = vmatpush.bf16.msra.mxu0 %v51
  %65 = vmatpush.bf16.msra.mxu0 %v50
  %66 = vmatmul.bf16.gmra.mxu0 %v56
  %v67 = vpop.f32.mrf.mxu0
  %v68 = vadd.f32 %v40, %v67
  %v69 = vpop.f32.mrf.mxu0
  %v70 = vadd.f32 %v40, %v69
  %71 = vdwg.mxu0
  %v72 = vpack.c.bf16 %v68, %v68
  %v73 = vpack.c.bf16 %v70, %v70
  %vm74 = vcmask 257024
  %75 = vst.msk [vmem:[%s6] sm:$0xf] %vm74, %v72
  %76 = vst.msk [vmem:[%s6 + $0x4] sm:$0xf] %vm74, %v73
  %79 = vrot.lane.b32.xlu0 %v72, 96
  %v80 = vpop.permute.xlu0 %79
  %81 = vrot.lane.b32.xlu0 %v73, 96
  %v82 = vpop.permute.xlu0 %81
  %85 = vst.msk [vmem:[%s7] sm:$0xf] %vm74, %v80
  %86 = vst.msk [vmem:[%s7 + $0x4] sm:$0xf] %vm74, %v82
  %v87 = vpack.c.bf16 %v28, %v27
  %v88 = vld [vmem:[%s4] sm:$0xf]
  %v89 = vld [vmem:[%s4 + $0x4] sm:$0xf]
  %v90 = vld [vmem:[%s4 + $0x8] sm:$0xf]
  %v91 = vld [vmem:[%s4 + $0xc] sm:$0xf]
  %v92 = vld [vmem:[%s5] sm:$0x1]
  %v94 = vperm.slane %v92, 0
  %v100 = vunpack.c.l.b16 %v88
  %v101 = vunpack.c.l.b16 %v89
  %v102 = vunpack.c.l.b16 %v90
  %v103 = vunpack.c.l.b16 %v91
  %v104 = vpack.c.b16 %v101, %v100
  %v105 = vpack.c.b16 %v103, %v102
  %v109 = vsel %vm54, %v87, 0
  %111 = vmatpush.bf16.msra.mxu0 0
  %112 = vmatpush.bf16.msra.mxu0 0
  %113 = vmatpush.bf16.msra.mxu0 0
  %114 = vmatpush.bf16.msra.mxu0 0
  %115 = vmatpush.bf16.msra.mxu0 0
  %116 = vmatpush.bf16.msra.mxu0 0
  %117 = vmatpush.bf16.msra.mxu0 %v105
  %118 = vmatpush.bf16.msra.mxu0 %v104
  %119 = vmatmul.bf16.gmra.mxu0 %v109
  %v120 = vpop.f32.mrf.mxu0
  %v121 = vadd.f32 %v94, %v120
  %v122 = vpop.f32.mrf.mxu0
  %v123 = vadd.f32 %v94, %v122
  %124 = vdwg.mxu0
  %v125 = vpack.c.bf16 %v121, %v121
  %v126 = vpack.c.bf16 %v123, %v123
  %127 = vst.msk [vmem:[%s8] sm:$0xf] %vm74, %v125
  %128 = vst.msk [vmem:[%s8 + $0x4] sm:$0xf] %vm74, %v126
  // Predicated region
  $region26: #{vision_language_encoder.6} parent=0 // pred_check
    _
  $region27: #{vision_language_encoder.6} parent=0 // pred_check_branch
    %130 = sbr.rel (0) target = $region29
  $region28: #{vision_language_encoder.6} parent=0 // pred_region
    _
  $region29: #{vision_language_encoder.6} parent=0 // pred_fallthru
    _
  // Predicated region
  $region30: #{vision_language_encoder.6} parent=0 // pred_check
    _
  $region31: #{vision_language_encoder.6} parent=0 // pred_check_branch
    %132 = sbr.rel (0) target = $region33
  $region32: #{vision_language_encoder.6} parent=0 // pred_region
    _
  $region33: #{vision_language_encoder.6} parent=0 // pred_fallthru
    _
  // Predicated region
  $region34: #{vision_language_encoder.6} parent=0 // pred_check
    _
  $region35: #{vision_language_encoder.6} parent=0 // pred_check_branch
    %134 = sbr.rel (0) target = $region37
  $region36: #{vision_language_encoder.6} parent=0 // pred_region
    _
  $region37: #{vision_language_encoder.6} parent=0 // pred_fallthru
    _
  // Predicated region
  $region38: #{vision_language_encoder.6} parent=0 // pred_check
    _
  $region39: #{vision_language_encoder.6} parent=0 // pred_check_branch
    %136 = sbr.rel (0) target = $region41
  $region40: #{vision_language_encoder.6} parent=0 // pred_region
    _
  $region41: #{vision_language_encoder.6} parent=0 // pred_fallthru
    _
  // Predicated region
  $region42: #{vision_language_encoder.6} parent=0 // pred_check
    _
  $region43: #{vision_language_encoder.6} parent=0 // pred_check_branch
    %138 = sbr.rel (0) target = $region45
  $region44: #{vision_language_encoder.6} parent=0 // pred_region
    _
  $region45: #{vision_language_encoder.6} parent=0 // pred_fallthru
    _
  // Predicated region
  $region46: #{vision_language_encoder.6} parent=0 // pred_check
    _
  $region47: #{vision_language_encoder.6} parent=0 // pred_check_branch
    %140 = sbr.rel (0) target = $region49
  $region48: #{vision_language_encoder.6} parent=0 // pred_region
    _
  $region49: #{vision_language_encoder.6} parent=0 // pred_fallthru
    _

// kernel: vision_language_encoder.7
$region0: #{vision_language_encoder.7}
  #allocation0 [shape = 'u32[]', space=smem, size = 0x4, offset = 0x4, fixed_abs, tag = 'smem constant byte address 0x4 - core index']
  #allocation1 [shape = 'u32[72,128]{1,0:T(1,128)}', space=vmem, size = 0x9000, scoped, tag = 'internal scratch']
  %s0 = inlined_call_operand.vmem [shape: bf16[2,8,32], index: 0, kind: input, shape index: {}]
  %s1 = inlined_call_operand.vmem [shape: bf16[2,8,32], index: 1, kind: input, shape index: {}]
  %s2 = inlined_call_operand.vmem [shape: bf16[2,8,32], index: 2, kind: input, shape index: {}]
  %s3 = inlined_call_operand.vmem [shape: f32[2,1,8], index: 3, kind: input, shape index: {}]
  %s4 = inlined_call_operand.vmem [shape: bf16[2,8,32], index: 4, kind: output, shape index: {}]
  %s5 = sld [smem:[#allocation0]]
  $region49: #{vision_language_encoder.7} parent=0
    _
  %s7 = ssub.s32 1, %s5
  %s8 = scalar_select 0, %s7, %s5
  loop: start=0, step=1, limit=4
  $region2: #{vision_language_encoder.7} parent=0 // loop_pre_header
    _
  $region3: #{vision_language_encoder.7} parent=0 // loop_header
    %s10 = sphi 0, %s14
    %p11 = scmp.ge.s32.totalorder %s10, 4
    %s17 = sphi 0, %s29
    %s18 = sphi 0, %s25
    %s19 = sphi 0, %s17
    %s20 = sphi 0, %s18
    %s21 = sphi 0, %s19
    %s22 = sphi 0, %s20
    %s34 = sphi 0, %s36
    %s37 = sphi 0, %s34
    %s38 = sphi 0, %s37
    %s54 = sphi 0, %s38
    %s60 = sphi 0, %s62
    %s63 = sphi 0, %s60
    %s64 = sphi 0, %s63
    %s80 = sphi 0, %s64
    %s86 = sphi 0, %s88
    %s89 = sphi 0, %s86
    %s90 = sphi 0, %s89
    %s106 = sphi 0, %s90
    %s112 = sphi 0, %s114
    %s115 = sphi 0, %s112
    %s116 = sphi 0, %s115
    %s132 = sphi 0, %s116
    %s140 = sphi 0, %s142
    %s143 = sphi 0, %s140
    %s144 = sphi 0, %s143
    %s160 = sphi 0, %s144
  $region4: #{vision_language_encoder.7} parent=0 // loop_header_branch
    %13 = sbr.rel (%p11) target = $region8
  $region5: #{vision_language_encoder.7} parent=0 // loop_body
    %s15 = ssub.s32 %s10, 1
    %s16 = ssub.s32 %s10, 2
    %s23 = sadd.s32 1, %s18
    %p24 = scmp.ge.s32.totalorder %s23, 1
    %s25 = scalar_select %p24, 0, %s23
    %s26 = sadd.s32 1, %s17
    %s27 = scalar_select %p24, %s26, %s17
    %p28 = scmp.ge.s32.totalorder %s27, 2
    %s29 = scalar_select %p28, 0, %s27
    %s30 = ssub.s32 %s17, %s29
    %s31 = ssub.s32 %s18, %s25
    %s32 = sor.u32 %s30, %s31
    %p33 = scmp.eq.s32.totalorder %s32, 0
    %s35 = sadd.s32 %s34, 1
    %s36 = scalar_select %p33, %s34, %s35
    %p39 = pneg %p33
    %p40 = scmp.eq.s32.totalorder %s10, 1
    %p41 = por %p39, %p40
    %p42 = scmp.ne.s32.totalorder %s34, %s37
    %p43 = scmp.eq.s32.totalorder %s10, 0
    %p44 = por %p42, %p43
    %p45 = scmp.ne.s32.totalorder %s34, %s37
    %p46 = scmp.eq.s32.totalorder %s15, 1
    %p47 = por %p45, %p46
    %p48 = scmp.ne.s32.totalorder %s37, %s38
    %p49 = scmp.eq.s32.totalorder %s15, 0
    %p50 = por %p48, %p49
    %p51 = scmp.ne.s32.totalorder %s37, %s38
    %p52 = scmp.eq.s32.totalorder %s16, 1
    %p53 = por %p51, %p52
    %p55 = scmp.ne.s32.totalorder %s38, %s54
    %p56 = scmp.eq.s32.totalorder %s16, 0
    %p57 = por %p55, %p56
    %s58 = ssub.s32 %s17, %s29
    %p59 = scmp.eq.s32.totalorder %s58, 0
    %s61 = sadd.s32 %s60, 1
    %s62 = scalar_select %p59, %s60, %s61
    %p65 = pneg %p59
    %p66 = scmp.eq.s32.totalorder %s10, 1
    %p67 = por %p65, %p66
    %p68 = scmp.ne.s32.totalorder %s60, %s63
    %p69 = scmp.eq.s32.totalorder %s10, 0
    %p70 = por %p68, %p69
    %p71 = scmp.ne.s32.totalorder %s60, %s63
    %p72 = scmp.eq.s32.totalorder %s15, 1
    %p73 = por %p71, %p72
    %p74 = scmp.ne.s32.totalorder %s63, %s64
    %p75 = scmp.eq.s32.totalorder %s15, 0
    %p76 = por %p74, %p75
    %p77 = scmp.ne.s32.totalorder %s63, %s64
    %p78 = scmp.eq.s32.totalorder %s16, 1
    %p79 = por %p77, %p78
    %p81 = scmp.ne.s32.totalorder %s64, %s80
    %p82 = scmp.eq.s32.totalorder %s16, 0
    %p83 = por %p81, %p82
    %s84 = ssub.s32 %s17, %s29
    %p85 = scmp.eq.s32.totalorder %s84, 0
    %s87 = sadd.s32 %s86, 1
    %s88 = scalar_select %p85, %s86, %s87
    %p91 = pneg %p85
    %p92 = scmp.eq.s32.totalorder %s10, 1
    %p93 = por %p91, %p92
    %p94 = scmp.ne.s32.totalorder %s86, %s89
    %p95 = scmp.eq.s32.totalorder %s10, 0
    %p96 = por %p94, %p95
    %p97 = scmp.ne.s32.totalorder %s86, %s89
    %p98 = scmp.eq.s32.totalorder %s15, 1
    %p99 = por %p97, %p98
    %p100 = scmp.ne.s32.totalorder %s89, %s90
    %p101 = scmp.eq.s32.totalorder %s15, 0
    %p102 = por %p100, %p101
    %p103 = scmp.ne.s32.totalorder %s89, %s90
    %p104 = scmp.eq.s32.totalorder %s16, 1
    %p105 = por %p103, %p104
    %p107 = scmp.ne.s32.totalorder %s90, %s106
    %p108 = scmp.eq.s32.totalorder %s16, 0
    %p109 = por %p107, %p108
    %s110 = ssub.s32 %s17, %s29
    %p111 = scmp.eq.s32.totalorder %s110, 0
    %s113 = sadd.s32 %s112, 1
    %s114 = scalar_select %p111, %s112, %s113
    %p117 = pneg %p111
    %p118 = scmp.eq.s32.totalorder %s10, 1
    %p119 = por %p117, %p118
    %p120 = scmp.ne.s32.totalorder %s112, %s115
    %p121 = scmp.eq.s32.totalorder %s10, 0
    %p122 = por %p120, %p121
    %p123 = scmp.ne.s32.totalorder %s112, %s115
    %p124 = scmp.eq.s32.totalorder %s15, 1
    %p125 = por %p123, %p124
    %p126 = scmp.ne.s32.totalorder %s115, %s116
    %p127 = scmp.eq.s32.totalorder %s15, 0
    %p128 = por %p126, %p127
    %p129 = scmp.ne.s32.totalorder %s115, %s116
    %p130 = scmp.eq.s32.totalorder %s16, 1
    %p131 = por %p129, %p130
    %p133 = scmp.ne.s32.totalorder %s116, %s132
    %p134 = scmp.eq.s32.totalorder %s16, 0
    %p135 = por %p133, %p134
    %s136 = ssub.s32 %s17, %s29
    %s137 = ssub.s32 %s18, %s25
    %s138 = sor.u32 %s136, %s137
    %p139 = scmp.eq.s32.totalorder %s138, 0
    %s141 = sadd.s32 %s140, 1
    %s142 = scalar_select %p139, %s140, %s141
    %p145 = pneg %p139
    %p146 = scmp.eq.s32.totalorder %s10, 1
    %p147 = por %p145, %p146
    %p148 = scmp.ne.s32.totalorder %s140, %s143
    %p149 = scmp.eq.s32.totalorder %s10, 0
    %p150 = por %p148, %p149
    %p151 = scmp.ne.s32.totalorder %s140, %s143
    %p152 = scmp.eq.s32.totalorder %s15, 1
    %p153 = por %p151, %p152
    %p154 = scmp.ne.s32.totalorder %s143, %s144
    %p155 = scmp.eq.s32.totalorder %s15, 0
    %p156 = por %p154, %p155
    %p157 = scmp.ne.s32.totalorder %s143, %s144
    %p158 = scmp.eq.s32.totalorder %s16, 1
    %p159 = por %p157, %p158
    %p161 = scmp.ne.s32.totalorder %s144, %s160
    %p162 = scmp.eq.s32.totalorder %s16, 0
    %p163 = por %p161, %p162
    %p164 = scmp.le.s32.totalorder 1, %s10
    %p165 = scmp.lt.s32.totalorder %s10, 3
    %p166 = pnand %p164, %p165
    %p167 = pneg %p166
    // Predicated region
    $region9: #{vision_language_encoder.7} parent=5 // pred_check
      _
    $region10: #{vision_language_encoder.7} parent=5 // pred_check_branch
      %169 = sbr.rel (%p166) target = $region12
    $region11: #{vision_language_encoder.7} parent=5 // pred_region
      %s170 = ssub.s32 %s10, 1
    $region12: #{vision_language_encoder.7} parent=5 // pred_fallthru
      _
    %p171 = scmp.lt.s32.totalorder %s10, 2
    // Predicated region
    $region13: #{vision_language_encoder.7} parent=5 // pred_check
      %p172 = pneg %p171
    $region14: #{vision_language_encoder.7} parent=5 // pred_check_branch
      %174 = sbr.rel (%p172) target = $region16
    $region15: #{vision_language_encoder.7} parent=5 // pred_region
      // Predicated region
      $region17: #{vision_language_encoder.7} parent=15 // pred_check
        %p175 = pneg %p44
      $region18: #{vision_language_encoder.7} parent=15 // pred_check_branch
        %177 = sbr.rel (%p175) target = $region20
      $region19: #{vision_language_encoder.7} parent=15 // pred_region
        %p178 = scmp.lt.s32.totalorder %s17, 1
        %s179 = scalar_select %p178, %s17, 1
        %p180 = scmp.lt.s32.totalorder %s18, 0
        %s181 = scalar_select %p180, %s18, 0
        %s182 = sadd.s32 %s181, %s179
        %s183 = smul.addr %s182, 4
        %s184 = scalar_lea.vmem %s0, %s183
      $region20: #{vision_language_encoder.7} parent=15 // pred_fallthru
        _
      // Predicated region
      $region21: #{vision_language_encoder.7} parent=15 // pred_check
        %p185 = pneg %p70
      $region22: #{vision_language_encoder.7} parent=15 // pred_check_branch
        %187 = sbr.rel (%p185) target = $region24
      $region23: #{vision_language_encoder.7} parent=15 // pred_region
        %p188 = scmp.lt.s32.totalorder %s17, 1
        %s189 = scalar_select %p188, %s17, 1
        %s190 = smul.addr %s189, 4
        %s191 = scalar_lea.vmem %s1, %s190
      $region24: #{vision_language_encoder.7} parent=15 // pred_fallthru
        _
      // Predicated region
      $region25: #{vision_language_encoder.7} parent=15 // pred_check
        %p192 = pneg %p96
      $region26: #{vision_language_encoder.7} parent=15 // pred_check_branch
        %194 = sbr.rel (%p192) target = $region28
      $region27: #{vision_language_encoder.7} parent=15 // pred_region
        %p195 = scmp.lt.s32.totalorder %s17, 1
        %s196 = scalar_select %p195, %s17, 1
        %s197 = smul.addr %s196, 4
        %s198 = scalar_lea.vmem %s2, %s197
      $region28: #{vision_language_encoder.7} parent=15 // pred_fallthru
        _
      // Predicated region
      $region29: #{vision_language_encoder.7} parent=15 // pred_check
        %p199 = pneg %p122
      $region30: #{vision_language_encoder.7} parent=15 // pred_check_branch
        %201 = sbr.rel (%p199) target = $region32
      $region31: #{vision_language_encoder.7} parent=15 // pred_region
        %p202 = scmp.lt.s32.totalorder %s17, 1
        %s203 = scalar_select %p202, %s17, 1
        %s204 = scalar_lea.vmem %s3, %s203
      $region32: #{vision_language_encoder.7} parent=15 // pred_fallthru
        _
    $region16: #{vision_language_encoder.7} parent=5 // pred_fallthru
      _
    %p205 = scmp.le.s32.totalorder 1, %s10
    %p206 = scmp.lt.s32.totalorder %s10, 3
    %p207 = pnand %p205, %p206
    %p208 = pneg %p207
    // Predicated region
    $region33: #{vision_language_encoder.7} parent=5 // pred_check
      _
    $region34: #{vision_language_encoder.7} parent=5 // pred_check_branch
      %210 = sbr.rel (%p207) target = $region36
    $region35: #{vision_language_encoder.7} parent=5 // pred_region
      %s211 = ssub.s32 %s10, 1
      %p212 = scmp.lt.s32.totalorder %s19, 1
      %s213 = scalar_select %p212, %s19, 1
      %p214 = scmp.lt.s32.totalorder %s20, 0
      %s215 = scalar_select %p214, %s20, 0
      %s216 = sadd.s32 %s215, %s213
      %s217 = smul.addr %s216, 4
      %s218 = scalar_lea.vmem %s0, %s217
      %p219 = pneg %p50
      %p220 = pneg %p47
      %p221 = scmp.lt.s32.totalorder %s19, 1
      %s222 = scalar_select %p221, %s19, 1
      %s223 = smul.addr %s222, 4
      %s224 = scalar_lea.vmem %s1, %s223
      %p225 = pneg %p76
      %p226 = pneg %p73
      %p227 = scmp.lt.s32.totalorder %s19, 1
      %s228 = scalar_select %p227, %s19, 1
      %s229 = smul.addr %s228, 4
      %s230 = scalar_lea.vmem %s2, %s229
      %p231 = pneg %p102
      %p232 = pneg %p99
      %p233 = scmp.lt.s32.totalorder %s19, 1
      %s234 = scalar_select %p233, %s19, 1
      %s235 = scalar_lea.vmem %s3, %s234
      %p236 = pneg %p128
      %p237 = pneg %p125
      %p238 = pneg %p156
      %p239 = pneg %p153
      %p240 = scmp.lt.s32.totalorder %s19, 1
      %s241 = scalar_select %p240, %s19, 1
      %p242 = scmp.lt.s32.totalorder %s20, 0
      %s243 = scalar_select %p242, %s20, 0
      %s244 = sadd.s32 %s243, %s241
      %s245 = smul.addr %s244, 4
      %s246 = scalar_lea.vmem %s4, %s245
      %p247 = scmp.lt.s32.totalorder %s19, 1
      %s248 = scalar_select %p247, %s19, 1
      %p249 = scmp.lt.s32.totalorder %s20, 0
      %s250 = scalar_select %p249, %s20, 0
      %s251 = sadd.s32 %s250, %s248
      %s252 = smul.addr %s251, 4
      %s253 = scalar_lea.vmem %s0, %s252
      %p254 = scmp.lt.s32.totalorder %s19, 1
      %s255 = scalar_select %p254, %s19, 1
      %s256 = smul.addr %s255, 4
      %s257 = scalar_lea.vmem %s1, %s256
      %p258 = scmp.lt.s32.totalorder %s19, 1
      %s259 = scalar_select %p258, %s19, 1
      %s260 = smul.addr %s259, 4
      %s261 = scalar_lea.vmem %s2, %s260
      %p262 = scmp.lt.s32.totalorder %s19, 1
      %s263 = scalar_select %p262, %s19, 1
      %s264 = scalar_lea.vmem %s3, %s263
      %p265 = scmp.lt.s32.totalorder %s19, 1
      %s266 = scalar_select %p265, %s19, 1
      %p267 = scmp.lt.s32.totalorder %s20, 0
      %s268 = scalar_select %p267, %s20, 0
      %s269 = sadd.s32 %s268, %s266
      %s270 = smul.addr %s269, 4
      %s271 = scalar_lea.vmem %s4, %s270
      %v273 = vld [vmem:[%s253] sm:$0xf]
      %v274 = vld [vmem:[%s257] sm:$0xf]
      %v275 = vld [vmem:[%s261] sm:$0xf]
      %v276 = vld [vmem:[%s264] sm:$0x1]
      %v278 = vperm.slane %v276, 0
      %vm280 = vcmask 64512
      %v282 = vsel %vm280, %v273, 0
      %v285 = vsel %vm280, %v274, 0
      %287 = vmatpush.bf16.xpose.msra.mxu0 0
      %288 = vmatpush.bf16.xpose.msra.mxu0 0
      %289 = vmatpush.bf16.xpose.msra.mxu0 0
      %290 = vmatpush.bf16.xpose.msra.mxu0 0
      %291 = vmatpush.bf16.xpose.msra.mxu0 0
      %292 = vmatpush.bf16.xpose.msra.mxu0 0
      %293 = vmatpush.bf16.xpose.msra.mxu0 0
      %294 = vmatpush.bf16.xpose.msra.mxu0 %v285
      %295 = vmatmul.bf16.gmra.mxu0 %v282
      %v296 = vpop.f32.mrf.mxu0
      %v297 = vadd.f32 %v278, %v296
      %v298 = vpop.f32.mrf.mxu0
      %299 = vdwg.mxu0
      %v300 = vsel %vm280, %v297, -inf
      %301 = vmax.xlane.f32.xlu0 %v300
      %v302 = vpop.xlane.xlu0 %301
      %v303 = vsub.f32 %v297, %v302
      %v304 = vmul.f32 %v303, 1.442695
      %v305 = vpow.pop %v304
      %v306 = vsel %vm280, %v305, 0.0
      %307 = vadd.xlane.f32.xlu0 %v306
      %v308 = vpop.xlane.xlu0 %307
      %v309 = vrcp.pop %v308
      %v310 = vmul.f32 %v305, %v309
      %v311 = vpack.c.bf16 %v310, %v310
      %v313 = vsel %vm280, %v311, 0
      %vm315 = vcmask 1043456
      %v317 = vsel %vm315, %v275, 0
      %319 = vmatpush.bf16.msra.mxu0 0
      %320 = vmatpush.bf16.msra.mxu0 0
      %321 = vmatpush.bf16.msra.mxu0 0
      %322 = vmatpush.bf16.msra.mxu0 0
      %323 = vmatpush.bf16.msra.mxu0 0
      %324 = vmatpush.bf16.msra.mxu0 0
      %325 = vmatpush.bf16.msra.mxu0 0
      %326 = vmatpush.bf16.msra.mxu0 %v317
      %327 = vmatmul.bf16.gmra.mxu0 %v313
      %v328 = vpop.f32.mrf.mxu0
      %v329 = vadd.f32 0.0, %v328
      %v330 = vpop.f32.mrf.mxu0
      %331 = vdwg.mxu0
      %v332 = vpack.c.bf16 %v329, %v329
      %vm333 = vcmask 60416
      %334 = vst.msk [vmem:[%s271] sm:$0xf] %vm333, %v332
      %v336 = vunpack.c.l.b16 %v273
      %v337 = vpack.c.b16 %v336, %v336
      %338 = vrot.lane.b32.xlu0 %v337, 120
      %v339 = vpop.permute.xlu0 %338
      %v341 = vunpack.c.l.b16 %v274
      %v342 = vpack.c.b16 %v341, %v341
      %343 = vrot.lane.b32.xlu0 %v342, 120
      %v344 = vpop.permute.xlu0 %343
      %v346 = vsel %vm280, %v339, 0
      %v349 = vsel %vm280, %v344, 0
      %351 = vmatpush.bf16.xpose.msra.mxu0 0
      %352 = vmatpush.bf16.xpose.msra.mxu0 0
      %353 = vmatpush.bf16.xpose.msra.mxu0 0
      %354 = vmatpush.bf16.xpose.msra.mxu0 0
      %355 = vmatpush.bf16.xpose.msra.mxu0 0
      %356 = vmatpush.bf16.xpose.msra.mxu0 0
      %357 = vmatpush.bf16.xpose.msra.mxu0 0
      %358 = vmatpush.bf16.xpose.msra.mxu0 %v349
      %359 = vmatmul.bf16.gmra.mxu0 %v346
      %v360 = vpop.f32.mrf.mxu0
      %v361 = vadd.f32 %v278, %v360
      %v362 = vpop.f32.mrf.mxu0
      %363 = vdwg.mxu0
      %v364 = vsel %vm280, %v361, -inf
      %365 = vmax.xlane.f32.xlu0 %v364
      %v366 = vpop.xlane.xlu0 %365
      %v367 = vsub.f32 %v361, %v366
      %v368 = vmul.f32 %v367, 1.442695
      %v369 = vpow.pop %v368
      %v370 = vsel %vm280, %v369, 0.0
      %371 = vadd.xlane.f32.xlu0 %v370
      %v372 = vpop.xlane.xlu0 %371
      %v373 = vrcp.pop %v372
      %v374 = vmul.f32 %v369, %v373
      %v375 = vpack.c.bf16 %v374, %v374
      %v377 = vunpack.c.l.b16 %v275
      %v378 = vpack.c.b16 %v377, %v377
      %379 = vrot.lane.b32.xlu0 %v378, 120
      %v380 = vpop.permute.xlu0 %379
      %v382 = vsel %vm280, %v375, 0
      %v385 = vsel %vm315, %v380, 0
      %387 = vmatpush.bf16.msra.mxu0 0
      %388 = vmatpush.bf16.msra.mxu0 0
      %389 = vmatpush.bf16.msra.mxu0 0
      %390 = vmatpush.bf16.msra.mxu0 0
      %391 = vmatpush.bf16.msra.mxu0 0
      %392 = vmatpush.bf16.msra.mxu0 0
      %393 = vmatpush.bf16.msra.mxu0 0
      %394 = vmatpush.bf16.msra.mxu0 %v385
      %395 = vmatmul.bf16.gmra.mxu0 %v382
      %v396 = vpop.f32.mrf.mxu0
      %v397 = vadd.f32 0.0, %v396
      %v398 = vpop.f32.mrf.mxu0
      %399 = vdwg.mxu0
      %v400 = vpack.c.bf16 %v397, %v397
      %402 = vrot.lane.b32.xlu0 %v400, 8
      %v403 = vpop.permute.xlu0 %402
      %vm405 = vcmask 126016
      %406 = vst.msk [vmem:[%s271] sm:$0xf] %vm405, %v403
      %407 = vrot.lane.b32.xlu0 %v337, 112
      %v408 = vpop.permute.xlu0 %407
      %409 = vrot.lane.b32.xlu0 %v342, 112
      %v410 = vpop.permute.xlu0 %409
      %v412 = vsel %vm280, %v408, 0
      %v415 = vsel %vm280, %v410, 0
      %417 = vmatpush.bf16.xpose.msra.mxu0 0
      %418 = vmatpush.bf16.xpose.msra.mxu0 0
      %419 = vmatpush.bf16.xpose.msra.mxu0 0
      %420 = vmatpush.bf16.xpose.msra.mxu0 0
      %421 = vmatpush.bf16.xpose.msra.mxu0 0
      %422 = vmatpush.bf16.xpose.msra.mxu0 0
      %423 = vmatpush.bf16.xpose.msra.mxu0 0
      %424 = vmatpush.bf16.xpose.msra.mxu0 %v415
      %425 = vmatmul.bf16.gmra.mxu0 %v412
      %v426 = vpop.f32.mrf.mxu0
      %v427 = vadd.f32 %v278, %v426
      %v428 = vpop.f32.mrf.mxu0
      %429 = vdwg.mxu0
      %v430 = vsel %vm280, %v427, -inf
      %431 = vmax.xlane.f32.xlu0 %v430
      %v432 = vpop.xlane.xlu0 %431
      %v433 = vsub.f32 %v427, %v432
      %v434 = vmul.f32 %v433, 1.442695
      %v435 = vpow.pop %v434
      %v436 = vsel %vm280, %v435, 0.0
      %437 = vadd.xlane.f32.xlu0 %v436
      %v438 = vpop.xlane.xlu0 %437
      %v439 = vrcp.pop %v438
      %v440 = vmul.f32 %v435, %v439
      %v441 = vpack.c.bf16 %v440, %v440
      %442 = vrot.lane.b32.xlu0 %v378, 112
      %v443 = vpop.permute.xlu0 %442
      %v445 = vsel %vm280, %v441, 0
      %v448 = vsel %vm315, %v443, 0
      %450 = vmatpush.bf16.msra.mxu0 0
      %451 = vmatpush.bf16.msra.mxu0 0
      %452 = vmatpush.bf16.msra.mxu0 0
      %453 = vmatpush.bf16.msra.mxu0 0
      %454 = vmatpush.bf16.msra.mxu0 0
      %455 = vmatpush.bf16.msra.mxu0 0
      %456 = vmatpush.bf16.msra.mxu0 0
      %457 = vmatpush.bf16.msra.mxu0 %v448
      %458 = vmatmul.bf16.gmra.mxu0 %v445
      %v459 = vpop.f32.mrf.mxu0
      %v460 = vadd.f32 0.0, %v459
      %v461 = vpop.f32.mrf.mxu0
      %462 = vdwg.mxu0
      %v463 = vpack.c.bf16 %v460, %v460
      %465 = vrot.lane.b32.xlu0 %v463, 16
      %v466 = vpop.permute.xlu0 %465
      %vm468 = vcmask 191616
      %469 = vst.msk [vmem:[%s271] sm:$0xf] %vm468, %v466
      %470 = vrot.lane.b32.xlu0 %v337, 104
      %v471 = vpop.permute.xlu0 %470
      %472 = vrot.lane.b32.xlu0 %v342, 104
      %v473 = vpop.permute.xlu0 %472
      %v475 = vsel %vm280, %v471, 0
      %v478 = vsel %vm280, %v473, 0
      %480 = vmatpush.bf16.xpose.msra.mxu0 0
      %481 = vmatpush.bf16.xpose.msra.mxu0 0
      %482 = vmatpush.bf16.xpose.msra.mxu0 0
      %483 = vmatpush.bf16.xpose.msra.mxu0 0
      %484 = vmatpush.bf16.xpose.msra.mxu0 0
      %485 = vmatpush.bf16.xpose.msra.mxu0 0
      %486 = vmatpush.bf16.xpose.msra.mxu0 0
      %487 = vmatpush.bf16.xpose.msra.mxu0 %v478
      %488 = vmatmul.bf16.gmra.mxu0 %v475
      %v489 = vpop.f32.mrf.mxu0
      %v490 = vadd.f32 %v278, %v489
      %v491 = vpop.f32.mrf.mxu0
      %492 = vdwg.mxu0
      %v493 = vsel %vm280, %v490, -inf
      %494 = vmax.xlane.f32.xlu0 %v493
      %v495 = vpop.xlane.xlu0 %494
      %v496 = vsub.f32 %v490, %v495
      %v497 = vmul.f32 %v496, 1.442695
      %v498 = vpow.pop %v497
      %v499 = vsel %vm280, %v498, 0.0
      %500 = vadd.xlane.f32.xlu0 %v499
      %v501 = vpop.xlane.xlu0 %500
      %v502 = vrcp.pop %v501
      %v503 = vmul.f32 %v498, %v502
      %v504 = vpack.c.bf16 %v503, %v503
      %505 = vrot.lane.b32.xlu0 %v378, 104
      %v506 = vpop.permute.xlu0 %505
      %v508 = vsel %vm280, %v504, 0
      %v511 = vsel %vm315, %v506, 0
      %513 = vmatpush.bf16.msra.mxu0 0
      %514 = vmatpush.bf16.msra.mxu0 0
      %515 = vmatpush.bf16.msra.mxu0 0
      %516 = vmatpush.bf16.msra.mxu0 0
      %517 = vmatpush.bf16.msra.mxu0 0
      %518 = vmatpush.bf16.msra.mxu0 0
      %519 = vmatpush.bf16.msra.mxu0 0
      %520 = vmatpush.bf16.msra.mxu0 %v511
      %521 = vmatmul.bf16.gmra.mxu0 %v508
      %v522 = vpop.f32.mrf.mxu0
      %v523 = vadd.f32 0.0, %v522
      %v524 = vpop.f32.mrf.mxu0
      %525 = vdwg.mxu0
      %v526 = vpack.c.bf16 %v523, %v523
      %528 = vrot.lane.b32.xlu0 %v526, 24
      %v529 = vpop.permute.xlu0 %528
      %vm531 = vcmask 257216
      %532 = vst.msk [vmem:[%s271] sm:$0xf] %vm531, %v529
      %p533 = scmp.lt.s32.totalorder %s19, 1
      %s534 = scalar_select %p533, %s19, 1
      %p535 = scmp.lt.s32.totalorder %s20, 0
      %s536 = scalar_select %p535, %s20, 0
      %s537 = sadd.s32 %s536, %s534
      %s538 = smul.addr %s537, 4
      %s539 = scalar_lea.vmem %s4, %s538
      // Predicated region
      $region37: #{vision_language_encoder.7} parent=35 // pred_check
        %p540 = pneg %p153
      $region38: #{vision_language_encoder.7} parent=35 // pred_check_branch
        %542 = sbr.rel (%p540) target = $region40
      $region39: #{vision_language_encoder.7} parent=35 // pred_region
        _
      $region40: #{vision_language_encoder.7} parent=35 // pred_fallthru
        _
    $region36: #{vision_language_encoder.7} parent=5 // pred_fallthru
      _
    %p543 = scmp.le.s32.totalorder 2, %s10
    // Predicated region
    $region41: #{vision_language_encoder.7} parent=5 // pred_check
      %p544 = pneg %p543
    $region42: #{vision_language_encoder.7} parent=5 // pred_check_branch
      %546 = sbr.rel (%p544) target = $region44
    $region43: #{vision_language_encoder.7} parent=5 // pred_region
      %s547 = ssub.s32 %s10, 2
      // Predicated region
      $region45: #{vision_language_encoder.7} parent=43 // pred_check
        %p548 = pneg %p159
      $region46: #{vision_language_encoder.7} parent=43 // pred_check_branch
        %550 = sbr.rel (%p548) target = $region48
      $region47: #{vision_language_encoder.7} parent=43 // pred_region
        %p551 = scmp.lt.s32.totalorder %s21, 1
        %s552 = scalar_select %p551, %s21, 1
        %p553 = scmp.lt.s32.totalorder %s22, 0
        %s554 = scalar_select %p553, %s22, 0
        %s555 = sadd.s32 %s554, %s552
        %s556 = smul.addr %s555, 4
        %s557 = scalar_lea.vmem %s4, %s556
      $region48: #{vision_language_encoder.7} parent=43 // pred_fallthru
        _
    $region44: #{vision_language_encoder.7} parent=5 // pred_fallthru
      _
  $region6: #{vision_language_encoder.7} parent=0 // loop_footer
    %s14 = sadd.s32 1, %s10
  $region7: #{vision_language_encoder.7} parent=0 // loop_footer_branch
    %9 = sbr.rel target = $region3
  $region8: #{vision_language_encoder.7} parent=0 // loop_exit
    _

</llo_original>
